<compile_context>
chip_gen: v7x
topology: tpu7x:2x2x1
jax: 0.10.0
libtpu: 0.0.40
codegen_flags: <defaults>
</compile_context>

<pallas_src>
import jax
import jax.numpy as jnp
import numpy as np
from jax.experimental import pallas as pl
from jax.experimental.pallas import tpu as pltpu


# ------------------------------- kernel body --------------------------------
def _make_kernel(H, W, Bt, se_dim):
    HW = H * W

    def kernel(x_ref, wexp_ref, dwtab_ref, colvec_ref, wproj_ref, bproj_ref,
               o_ref):
        # Packed per-channel columns: [bexp, fb1, bn2_scale, bn2_bias, fb2,
        #                              se_w1.T, se_w2]
        bexp = colvec_ref[:, 0:1]                         # (hidden, 1)
        fb1 = colvec_ref[:, 1:2]
        bn2s = colvec_ref[:, 2:3]
        bn2b = colvec_ref[:, 3:4]
        fb2 = colvec_ref[:, 4:5]
        w1t = colvec_ref[:, 5:5 + se_dim]                 # (hidden, se_dim)
        w2 = colvec_ref[:, 5 + se_dim:5 + 2 * se_dim]     # (hidden, se_dim)

        wexp = wexp_ref[...]                              # (hidden, Cin) bf16
        wproj = wproj_ref[...]                            # (oup, hidden) bf16
        bproj = bproj_ref[...]                            # (oup, 1) f32

        def dw3x3(h, ci, bias=None):
            """Depthwise 3x3 'same' conv in (C, H*W) layout via lane rolls.

            Tap weight x boundary mask is pre-folded host-side into
            dwtab[ci, k] of shape (hidden, HW); taps are tree-accumulated
            (one partial per kernel row) to expose VALU ILP.
            """
            parts = []
            for dy in range(3):
                part = None
                for dx in range(3):
                    k = dy * 3 + dx
                    s = (dy - 1) * W + (dx - 1)           # flat source offset
                    src = h if s == 0 else pltpu.roll(h, (-s) % HW, 1)
                    term = src * dwtab_ref[ci, k]         # (hidden, HW)
                    part = term if part is None else part + term
                parts.append(part)
            acc = (parts[0] + parts[2]) + parts[1]
            if bias is not None:
                acc = acc + bias
            return acc

        # Statically unrolled loop over the Bt images of this grid step; the
        # per-image pipelines are independent so the scheduler can interleave.
        for b in range(Bt):
            x = x_ref[b]                                  # (Cin, HW) f32

            # 1x1 expand conv (bn0, bn1 folded).  bf16 MXU operands, f32 acc.
            h = jnp.dot(wexp, x.astype(jnp.bfloat16),
                        preferred_element_type=jnp.float32) + bexp

            # FReLU #1: max(h, BN(dwconv3x3(h)))  (BN scale folded into taps)
            h = jnp.maximum(h, dw3x3(h, 0, fb1))

            # main depthwise 3x3 conv (groups = hidden)
            h = dw3x3(h, 1)

            # SE: sigmoid(W2 @ relu(W1 @ avgpool(h))).  Pool first, then two
            # tiny FCs as VPU multiplies + XLU reduces (no broadcast matmul,
            # sigmoid on a single (hidden, 1) column).
            pooled = jnp.mean(h, axis=1, keepdims=True)                 # (hid,1)
            s1 = jnp.maximum(
                jnp.sum(pooled * w1t, axis=0, keepdims=True), 0.0)      # (1,se)
            g = jax.nn.sigmoid(
                jnp.sum(w2 * s1, axis=1, keepdims=True))                # (hid,1)
            h = h * g

            # BatchNorm2d(hidden)
            h = h * bn2s + bn2b

            # FReLU #2
            h = jnp.maximum(h, dw3x3(h, 2, fb2))

            # 1x1 project conv (bn3 folded) + residual
            out = jnp.dot(wproj, h.astype(jnp.bfloat16),
                          preferred_element_type=jnp.float32)
            o_ref[b] = x + out + bproj

    return kernel


# ----------------------------- host-side helpers ----------------------------
def _make_tap_mask(H, W):
    """(9, H*W) float masks: 1.0 where the 3x3 tap source pixel is in-bounds."""
    row = np.arange(H * W) // W
    col = np.arange(H * W) % W
    masks = []
    for dy in range(3):
        for dx in range(3):
            ok = np.ones(H * W, dtype=bool)
            if dy == 0:
                ok &= row >= 1
            if dy == 2:
                ok &= row <= H - 2
            if dx == 0:
                ok &= col >= 1
            if dx == 2:
                ok &= col <= W - 2
            masks.append(ok.astype(np.float32))
    return jnp.asarray(np.stack(masks, axis=0))


def _pick_block_batch(B):
    """Largest images-per-step that still leaves >= 2 grid blocks (v7x)."""
    target_blocks = 2 if B >= 2 else 1
    for bt in range(max(B // target_blocks, 1), 0, -1):
        if B % bt == 0 and (B // bt) >= target_blocks:
            return bt
    return 1


def mbconv_rw_forward(x_nchw, fw, block_batch=None):
    """x_nchw: (B, C, H, W) float32 (PyTorch layout). Returns same layout."""
    B, C, H, W = x_nchw.shape
    HW = H * W
    oup = fw["wproj"].shape[0]
    se_dim = (fw["colvec"].shape[1] - 5) // 2
    Bt = _pick_block_batch(B) if block_batch is None else block_batch
    assert B % Bt == 0

    x2 = x_nchw.reshape(B, C, HW)                       # free reshape (contiguous)

    in_specs = [
        pl.BlockSpec((Bt, C, HW), lambda i: (i, 0, 0)),
        pl.BlockSpec(fw["wexp"].shape, lambda i: (0, 0)),
        pl.BlockSpec(fw["dwtab"].shape, lambda i: (0, 0, 0, 0)),
        pl.BlockSpec(fw["colvec"].shape, lambda i: (0, 0)),
        pl.BlockSpec(fw["wproj"].shape, lambda i: (0, 0)),
        pl.BlockSpec(fw["bproj"].shape, lambda i: (0, 0)),
    ]
    out_specs = pl.BlockSpec((Bt, oup, HW), lambda i: (i, 0, 0))

    grid_spec = pltpu.PrefetchScalarGridSpec(
        num_scalar_prefetch=0,
        grid=(B // Bt,),
        in_specs=in_specs,
        out_specs=out_specs,
    )
    fn = pl.pallas_call(
        _make_kernel(H, W, Bt, se_dim),
        out_shape=jax.ShapeDtypeStruct((B, oup, HW), jnp.float32),
        grid_spec=grid_spec,
        compiler_params=pltpu.CompilerParams(
            dimension_semantics=("parallel",)),
    )
    out = fn(x2, fw["wexp"], fw["dwtab"], fw["colvec"], fw["wproj"],
             fw["bproj"])
    return out.reshape(B, oup, H, W)


# ----------------------------- parameter setup ------------------------------
def make_params(key, inp, oup, hidden, se_dim):
    keys = iter(jax.random.split(key, 32))

    def nrm(shape, scale):
        return scale * jax.random.normal(next(keys), shape, jnp.float32)

    def bn_fold(c):
        gamma = 1.0 + 0.1 * jax.random.normal(next(keys), (c,), jnp.float32)
        beta = 0.1 * jax.random.normal(next(keys), (c,), jnp.float32)
        mean = 0.1 * jax.random.normal(next(keys), (c,), jnp.float32)
        var = 1.0 + 0.5 * jax.random.uniform(next(keys), (c,), jnp.float32)
        eps = 1e-5
        scale = gamma / jnp.sqrt(var + eps)
        bias = beta - mean * scale
        return jnp.stack([scale, bias], axis=0)   # (2, C): inference-folded BN

    return dict(
        bn0=bn_fold(inp),
        w_exp=nrm((hidden, inp), 0.3),     # 1x1 conv inp->hidden
        bn1=bn_fold(hidden),
        fw1=nrm((hidden, 9), 0.2),         # FReLU#1 depthwise 3x3 taps
        fsb1=bn_fold(hidden),
        dww=nrm((hidden, 9), 0.2),         # main depthwise 3x3 taps
        se_w1=nrm((se_dim, hidden), 0.3),  # Linear(hidden -> se_dim)
        se_w2=nrm((hidden, se_dim), 0.3),  # Linear(se_dim -> hidden)
        bn2=bn_fold(hidden),
        fw2=nrm((hidden, 9), 0.2),         # FReLU#2 depthwise 3x3 taps
        fsb2=bn_fold(hidden),
        w_proj=nrm((oup, hidden), 0.3),    # 1x1 conv hidden->oup
        bn3=bn_fold(oup),
    )


def fold_params(p, H, W):
    """Fold BN into conv weights, pre-fold tap masks, pack operands (host)."""
    s0, b0 = p["bn0"][0], p["bn0"][1]
    s1, b1 = p["bn1"][0], p["bn1"][1]
    s2, b2 = p["bn2"][0], p["bn2"][1]
    s3, b3 = p["bn3"][0], p["bn3"][1]
    fs1, fbi1 = p["fsb1"][0], p["fsb1"][1]
    fs2, fbi2 = p["fsb2"][0], p["fsb2"][1]

    # bf16 weights for the two 1x1 MXU matmuls (f32 accumulation in-kernel).
    wexp = (s1[:, None] * p["w_exp"] * s0[None, :]).astype(jnp.bfloat16)
    bexp = s1 * (p["w_exp"] @ b0) + b1                    # (hidden,)
    fw1 = fs1[:, None] * p["fw1"]                         # (hidden, 9)
    fw2 = fs2[:, None] * p["fw2"]
    wproj = (s3[:, None] * p["w_proj"]).astype(jnp.bfloat16)
    bproj = b3[:, None].astype(jnp.float32)               # (oup, 1)

    # Pre-folded tap-weight x boundary-mask tables: (3, 9, hidden, H*W).
    mask = _make_tap_mask(H, W)                           # (9, HW)

    def prefold(w9):                                      # (hidden,9)->(9,hid,HW)
        return w9.T[:, :, None] * mask[:, None, :]

    dwtab = jnp.stack([prefold(fw1), prefold(p["dww"]), prefold(fw2)],
                      axis=0).astype(jnp.float32)

    # Single packed per-channel operand: (hidden, 5 + 2*se_dim).
    colvec = jnp.concatenate(
        [bexp[:, None], fbi1[:, None], s2[:, None], b2[:, None], fbi2[:, None],
         p["se_w1"].T, p["se_w2"]], axis=1).astype(jnp.float32)

    return dict(wexp=wexp, dwtab=dwtab, colvec=colvec, wproj=wproj,
                bproj=bproj)


# --------------------------- pure-JAX reference -----------------------------
def _reference_forward(x, p):
    """Unfused f32 NCHW reference matching the PyTorch module (BN eval mode)."""
    B, C, H, W = x.shape

    def bn(t, sb):
        return t * sb[0][None, :, None, None] + sb[1][None, :, None, None]

    def dw3x3(t, w9):   # w9: (C, 9)
        tp = jnp.pad(t, ((0, 0), (0, 0), (1, 1), (1, 1)))
        out = jnp.zeros_like(t)
        for dy in range(3):
            for dx in range(3):
                out = out + (tp[:, :, dy:dy + H, dx:dx + W]
                             * w9[:, dy * 3 + dx][None, :, None, None])
        return out

    y = bn(x, p["bn0"])
    h = jnp.einsum("oc,bchw->bohw", p["w_exp"], y)
    h = bn(h, p["bn1"])
    h = jnp.maximum(h, bn(dw3x3(h, p["fw1"]), p["fsb1"]))
    h = dw3x3(h, p["dww"])
    pooled = jnp.mean(h, axis=(2, 3))                        # (B, hidden)
    s = jax.nn.relu(pooled @ p["se_w1"].T)                   # (B, se_dim)
    s = jax.nn.sigmoid(s @ p["se_w2"].T)                     # (B, hidden)
    h = h * s[:, :, None, None]
    h = bn(h, p["bn2"])
    h = jnp.maximum(h, bn(dw3x3(h, p["fw2"]), p["fsb2"]))
    out = jnp.einsum("oc,bchw->bohw", p["w_proj"], h)
    out = bn(out, p["bn3"])
    return x + out


if __name__ == "__main__":
    # inp = oup = 4 (residual path), H*W = 256 lanes, hidden = 16, se = 4.
    # B = 4 -> 2 images per grid step (amortized overhead) x 2 parallel blocks.
    B, C, Hs, Ws = 4, 4, 16, 16
    expansion = 4
    hidden = C * expansion               # 16
    se_dim = max(1, int(hidden * 0.25))  # 4

    key = jax.random.PRNGKey(0)
    kx, kp = jax.random.split(key)

    x_nchw = jax.random.normal(kx, (B, C, Hs, Ws), jnp.float32)  # PyTorch layout

    params = make_params(kp, C, C, hidden, se_dim)
    folded = fold_params(params, Hs, Ws)

    out = mbconv_rw_forward(x_nchw, folded)
    out = jax.block_until_ready(out)

    ref = _reference_forward(x_nchw, params)
    # Tolerance accounts for bf16 (~2^-9 rel) operands in the two 1x1 MXU
    # matmuls; the rest of the pipeline is exact f32.
    np.testing.assert_allclose(np.asarray(out), np.asarray(ref),
                               atol=5e-2, rtol=2e-2)
    assert out.shape == (B, C, Hs, Ws)
    print("KERNEL_OK")
</pallas_src>

<mosaic_0001>
module attributes {stable_mosaic.version = 11 : i64} {
  func.func @kernel(%arg0: i32, %arg1: memref<2x4x256xf32, #tpu.memory_space<vmem>>, %arg2: memref<16x4xbf16, #tpu.memory_space<vmem>>, %arg3: memref<3x9x16x256xf32, #tpu.memory_space<vmem>>, %arg4: memref<16x13xf32, #tpu.memory_space<vmem>>, %arg5: memref<4x16xbf16, #tpu.memory_space<vmem>>, %arg6: memref<4x1xf32, #tpu.memory_space<vmem>>, %arg7: memref<2x4x256xf32, #tpu.memory_space<vmem>>) attributes {dimension_semantics = [#tpu.dimension_semantics<parallel>], iteration_bounds = array<i64: 2>, scalar_prefetch = 0 : i64, scratch_operands = 0 : i64, tpu.core_type = #tpu.core_type<tc>, window_params = [{transform_indices = @transform_0, window_bounds = array<i64: 2, 4, 256>}, {pipeline_mode = #tpu.pipeline_mode<synchronous>, transform_indices = @transform_1, window_bounds = array<i64: 16, 4>}, {pipeline_mode = #tpu.pipeline_mode<synchronous>, transform_indices = @transform_2, window_bounds = array<i64: 3, 9, 16, 256>}, {pipeline_mode = #tpu.pipeline_mode<synchronous>, transform_indices = @transform_3, window_bounds = array<i64: 16, 13>}, {pipeline_mode = #tpu.pipeline_mode<synchronous>, transform_indices = @transform_4, window_bounds = array<i64: 4, 16>}, {pipeline_mode = #tpu.pipeline_mode<synchronous>, transform_indices = @transform_5, window_bounds = array<i64: 4, 1>}, {transform_indices = @transform_6, window_bounds = array<i64: 2, 4, 256>}]} {
    %c0 = arith.constant 0 : index
    %c0_0 = arith.constant 0 : index
    %0 = vector.load %arg4[%c0, %c0_0] : memref<16x13xf32, #tpu.memory_space<vmem>>, vector<16x1xf32>
    %c0_1 = arith.constant 0 : index
    %c1 = arith.constant 1 : index
    %1 = vector.load %arg4[%c0_1, %c1] : memref<16x13xf32, #tpu.memory_space<vmem>>, vector<16x1xf32>
    %c0_2 = arith.constant 0 : index
    %c2 = arith.constant 2 : index
    %2 = vector.load %arg4[%c0_2, %c2] : memref<16x13xf32, #tpu.memory_space<vmem>>, vector<16x1xf32>
    %c0_3 = arith.constant 0 : index
    %c3 = arith.constant 3 : index
    %3 = vector.load %arg4[%c0_3, %c3] : memref<16x13xf32, #tpu.memory_space<vmem>>, vector<16x1xf32>
    %c0_4 = arith.constant 0 : index
    %c4 = arith.constant 4 : index
    %4 = vector.load %arg4[%c0_4, %c4] : memref<16x13xf32, #tpu.memory_space<vmem>>, vector<16x1xf32>
    %c0_5 = arith.constant 0 : index
    %c5 = arith.constant 5 : index
    %5 = vector.load %arg4[%c0_5, %c5] : memref<16x13xf32, #tpu.memory_space<vmem>>, vector<16x4xf32>
    %c0_6 = arith.constant 0 : index
    %c9 = arith.constant 9 : index
    %6 = vector.load %arg4[%c0_6, %c9] : memref<16x13xf32, #tpu.memory_space<vmem>>, vector<16x4xf32>
    %c0_7 = arith.constant 0 : index
    %c0_8 = arith.constant 0 : index
    %7 = vector.load %arg2[%c0_7, %c0_8] : memref<16x4xbf16, #tpu.memory_space<vmem>>, vector<16x4xbf16>
    %c0_9 = arith.constant 0 : index
    %c0_10 = arith.constant 0 : index
    %8 = vector.load %arg5[%c0_9, %c0_10] : memref<4x16xbf16, #tpu.memory_space<vmem>>, vector<4x16xbf16>
    %c0_11 = arith.constant 0 : index
    %c0_12 = arith.constant 0 : index
    %9 = vector.load %arg6[%c0_11, %c0_12] : memref<4x1xf32, #tpu.memory_space<vmem>>, vector<4x1xf32>
    %c0_13 = arith.constant 0 : index
    %c0_14 = arith.constant 0 : index
    %c0_15 = arith.constant 0 : index
    %10 = vector.load %arg1[%c0_13, %c0_14, %c0_15] : memref<2x4x256xf32, #tpu.memory_space<vmem>>, vector<1x4x256xf32>
    %11 = vector.shape_cast %10 : vector<1x4x256xf32> to vector<4x256xf32>
    %12 = arith.truncf %11 : vector<4x256xf32> to vector<4x256xbf16>
    %cst = arith.constant dense<0.000000e+00> : vector<16x256xf32>
    %13 = tpu.matmul %7, %12, %cst {dimension_numbers = #tpu.dot_dimension_numbers<[1], [0], [0], [1], [0, 0, 1, 1], [], []>} : vector<16x4xbf16>, vector<4x256xbf16>, vector<16x256xf32> -> vector<16x256xf32>
    %14 = vector.broadcast %0 : vector<16x1xf32> to vector<16x256xf32>
    %15 = arith.addf %13, %14 : vector<16x256xf32>
    %c17_i32 = arith.constant 17 : i32
    %16 = tpu.dynamic_rotate %15 by %c17_i32 dim 1 : vector<16x256xf32>, i32 -> vector<16x256xf32>
    %c0_16 = arith.constant 0 : index
    %c0_17 = arith.constant 0 : index
    %c0_18 = arith.constant 0 : index
    %c0_19 = arith.constant 0 : index
    %17 = vector.load %arg3[%c0_16, %c0_17, %c0_18, %c0_19] : memref<3x9x16x256xf32, #tpu.memory_space<vmem>>, vector<1x1x16x256xf32>
    %18 = vector.shape_cast %17 : vector<1x1x16x256xf32> to vector<16x256xf32>
    %19 = arith.mulf %16, %18 : vector<16x256xf32>
    %c16_i32 = arith.constant 16 : i32
    %20 = tpu.dynamic_rotate %15 by %c16_i32 dim 1 : vector<16x256xf32>, i32 -> vector<16x256xf32>
    %c0_20 = arith.constant 0 : index
    %c1_21 = arith.constant 1 : index
    %c0_22 = arith.constant 0 : index
    %c0_23 = arith.constant 0 : index
    %21 = vector.load %arg3[%c0_20, %c1_21, %c0_22, %c0_23] : memref<3x9x16x256xf32, #tpu.memory_space<vmem>>, vector<1x1x16x256xf32>
    %22 = vector.shape_cast %21 : vector<1x1x16x256xf32> to vector<16x256xf32>
    %23 = arith.mulf %20, %22 : vector<16x256xf32>
    %24 = arith.addf %19, %23 : vector<16x256xf32>
    %c15_i32 = arith.constant 15 : i32
    %25 = tpu.dynamic_rotate %15 by %c15_i32 dim 1 : vector<16x256xf32>, i32 -> vector<16x256xf32>
    %c0_24 = arith.constant 0 : index
    %c2_25 = arith.constant 2 : index
    %c0_26 = arith.constant 0 : index
    %c0_27 = arith.constant 0 : index
    %26 = vector.load %arg3[%c0_24, %c2_25, %c0_26, %c0_27] : memref<3x9x16x256xf32, #tpu.memory_space<vmem>>, vector<1x1x16x256xf32>
    %27 = vector.shape_cast %26 : vector<1x1x16x256xf32> to vector<16x256xf32>
    %28 = arith.mulf %25, %27 : vector<16x256xf32>
    %29 = arith.addf %24, %28 : vector<16x256xf32>
    %c1_i32 = arith.constant 1 : i32
    %30 = tpu.dynamic_rotate %15 by %c1_i32 dim 1 : vector<16x256xf32>, i32 -> vector<16x256xf32>
    %c0_28 = arith.constant 0 : index
    %c3_29 = arith.constant 3 : index
    %c0_30 = arith.constant 0 : index
    %c0_31 = arith.constant 0 : index
    %31 = vector.load %arg3[%c0_28, %c3_29, %c0_30, %c0_31] : memref<3x9x16x256xf32, #tpu.memory_space<vmem>>, vector<1x1x16x256xf32>
    %32 = vector.shape_cast %31 : vector<1x1x16x256xf32> to vector<16x256xf32>
    %33 = arith.mulf %30, %32 : vector<16x256xf32>
    %c0_32 = arith.constant 0 : index
    %c4_33 = arith.constant 4 : index
    %c0_34 = arith.constant 0 : index
    %c0_35 = arith.constant 0 : index
    %34 = vector.load %arg3[%c0_32, %c4_33, %c0_34, %c0_35] : memref<3x9x16x256xf32, #tpu.memory_space<vmem>>, vector<1x1x16x256xf32>
    %35 = vector.shape_cast %34 : vector<1x1x16x256xf32> to vector<16x256xf32>
    %36 = arith.mulf %15, %35 : vector<16x256xf32>
    %37 = arith.addf %33, %36 : vector<16x256xf32>
    %c255_i32 = arith.constant 255 : i32
    %38 = tpu.dynamic_rotate %15 by %c255_i32 dim 1 : vector<16x256xf32>, i32 -> vector<16x256xf32>
    %c0_36 = arith.constant 0 : index
    %c5_37 = arith.constant 5 : index
    %c0_38 = arith.constant 0 : index
    %c0_39 = arith.constant 0 : index
    %39 = vector.load %arg3[%c0_36, %c5_37, %c0_38, %c0_39] : memref<3x9x16x256xf32, #tpu.memory_space<vmem>>, vector<1x1x16x256xf32>
    %40 = vector.shape_cast %39 : vector<1x1x16x256xf32> to vector<16x256xf32>
    %41 = arith.mulf %38, %40 : vector<16x256xf32>
    %42 = arith.addf %37, %41 : vector<16x256xf32>
    %c241_i32 = arith.constant 241 : i32
    %43 = tpu.dynamic_rotate %15 by %c241_i32 dim 1 : vector<16x256xf32>, i32 -> vector<16x256xf32>
    %c0_40 = arith.constant 0 : index
    %c6 = arith.constant 6 : index
    %c0_41 = arith.constant 0 : index
    %c0_42 = arith.constant 0 : index
    %44 = vector.load %arg3[%c0_40, %c6, %c0_41, %c0_42] : memref<3x9x16x256xf32, #tpu.memory_space<vmem>>, vector<1x1x16x256xf32>
    %45 = vector.shape_cast %44 : vector<1x1x16x256xf32> to vector<16x256xf32>
    %46 = arith.mulf %43, %45 : vector<16x256xf32>
    %c240_i32 = arith.constant 240 : i32
    %47 = tpu.dynamic_rotate %15 by %c240_i32 dim 1 : vector<16x256xf32>, i32 -> vector<16x256xf32>
    %c0_43 = arith.constant 0 : index
    %c7 = arith.constant 7 : index
    %c0_44 = arith.constant 0 : index
    %c0_45 = arith.constant 0 : index
    %48 = vector.load %arg3[%c0_43, %c7, %c0_44, %c0_45] : memref<3x9x16x256xf32, #tpu.memory_space<vmem>>, vector<1x1x16x256xf32>
    %49 = vector.shape_cast %48 : vector<1x1x16x256xf32> to vector<16x256xf32>
    %50 = arith.mulf %47, %49 : vector<16x256xf32>
    %51 = arith.addf %46, %50 : vector<16x256xf32>
    %c239_i32 = arith.constant 239 : i32
    %52 = tpu.dynamic_rotate %15 by %c239_i32 dim 1 : vector<16x256xf32>, i32 -> vector<16x256xf32>
    %c0_46 = arith.constant 0 : index
    %c8 = arith.constant 8 : index
    %c0_47 = arith.constant 0 : index
    %c0_48 = arith.constant 0 : index
    %53 = vector.load %arg3[%c0_46, %c8, %c0_47, %c0_48] : memref<3x9x16x256xf32, #tpu.memory_space<vmem>>, vector<1x1x16x256xf32>
    %54 = vector.shape_cast %53 : vector<1x1x16x256xf32> to vector<16x256xf32>
    %55 = arith.mulf %52, %54 : vector<16x256xf32>
    %56 = arith.addf %51, %55 : vector<16x256xf32>
    %57 = arith.addf %29, %56 : vector<16x256xf32>
    %58 = arith.addf %57, %42 : vector<16x256xf32>
    %59 = vector.broadcast %1 : vector<16x1xf32> to vector<16x256xf32>
    %60 = arith.addf %58, %59 : vector<16x256xf32>
    %61 = arith.maximumf %15, %60 : vector<16x256xf32>
    %c17_i32_49 = arith.constant 17 : i32
    %62 = tpu.dynamic_rotate %61 by %c17_i32_49 dim 1 : vector<16x256xf32>, i32 -> vector<16x256xf32>
    %c1_50 = arith.constant 1 : index
    %c0_51 = arith.constant 0 : index
    %c0_52 = arith.constant 0 : index
    %c0_53 = arith.constant 0 : index
    %63 = vector.load %arg3[%c1_50, %c0_51, %c0_52, %c0_53] : memref<3x9x16x256xf32, #tpu.memory_space<vmem>>, vector<1x1x16x256xf32>
    %64 = vector.shape_cast %63 : vector<1x1x16x256xf32> to vector<16x256xf32>
    %65 = arith.mulf %62, %64 : vector<16x256xf32>
    %c16_i32_54 = arith.constant 16 : i32
    %66 = tpu.dynamic_rotate %61 by %c16_i32_54 dim 1 : vector<16x256xf32>, i32 -> vector<16x256xf32>
    %c1_55 = arith.constant 1 : index
    %c1_56 = arith.constant 1 : index
    %c0_57 = arith.constant 0 : index
    %c0_58 = arith.constant 0 : index
    %67 = vector.load %arg3[%c1_55, %c1_56, %c0_57, %c0_58] : memref<3x9x16x256xf32, #tpu.memory_space<vmem>>, vector<1x1x16x256xf32>
    %68 = vector.shape_cast %67 : vector<1x1x16x256xf32> to vector<16x256xf32>
    %69 = arith.mulf %66, %68 : vector<16x256xf32>
    %70 = arith.addf %65, %69 : vector<16x256xf32>
    %c15_i32_59 = arith.constant 15 : i32
    %71 = tpu.dynamic_rotate %61 by %c15_i32_59 dim 1 : vector<16x256xf32>, i32 -> vector<16x256xf32>
    %c1_60 = arith.constant 1 : index
    %c2_61 = arith.constant 2 : index
    %c0_62 = arith.constant 0 : index
    %c0_63 = arith.constant 0 : index
    %72 = vector.load %arg3[%c1_60, %c2_61, %c0_62, %c0_63] : memref<3x9x16x256xf32, #tpu.memory_space<vmem>>, vector<1x1x16x256xf32>
    %73 = vector.shape_cast %72 : vector<1x1x16x256xf32> to vector<16x256xf32>
    %74 = arith.mulf %71, %73 : vector<16x256xf32>
    %75 = arith.addf %70, %74 : vector<16x256xf32>
    %c1_i32_64 = arith.constant 1 : i32
    %76 = tpu.dynamic_rotate %61 by %c1_i32_64 dim 1 : vector<16x256xf32>, i32 -> vector<16x256xf32>
    %c1_65 = arith.constant 1 : index
    %c3_66 = arith.constant 3 : index
    %c0_67 = arith.constant 0 : index
    %c0_68 = arith.constant 0 : index
    %77 = vector.load %arg3[%c1_65, %c3_66, %c0_67, %c0_68] : memref<3x9x16x256xf32, #tpu.memory_space<vmem>>, vector<1x1x16x256xf32>
    %78 = vector.shape_cast %77 : vector<1x1x16x256xf32> to vector<16x256xf32>
    %79 = arith.mulf %76, %78 : vector<16x256xf32>
    %c1_69 = arith.constant 1 : index
    %c4_70 = arith.constant 4 : index
    %c0_71 = arith.constant 0 : index
    %c0_72 = arith.constant 0 : index
    %80 = vector.load %arg3[%c1_69, %c4_70, %c0_71, %c0_72] : memref<3x9x16x256xf32, #tpu.memory_space<vmem>>, vector<1x1x16x256xf32>
    %81 = vector.shape_cast %80 : vector<1x1x16x256xf32> to vector<16x256xf32>
    %82 = arith.mulf %61, %81 : vector<16x256xf32>
    %83 = arith.addf %79, %82 : vector<16x256xf32>
    %c255_i32_73 = arith.constant 255 : i32
    %84 = tpu.dynamic_rotate %61 by %c255_i32_73 dim 1 : vector<16x256xf32>, i32 -> vector<16x256xf32>
    %c1_74 = arith.constant 1 : index
    %c5_75 = arith.constant 5 : index
    %c0_76 = arith.constant 0 : index
    %c0_77 = arith.constant 0 : index
    %85 = vector.load %arg3[%c1_74, %c5_75, %c0_76, %c0_77] : memref<3x9x16x256xf32, #tpu.memory_space<vmem>>, vector<1x1x16x256xf32>
    %86 = vector.shape_cast %85 : vector<1x1x16x256xf32> to vector<16x256xf32>
    %87 = arith.mulf %84, %86 : vector<16x256xf32>
    %88 = arith.addf %83, %87 : vector<16x256xf32>
    %c241_i32_78 = arith.constant 241 : i32
    %89 = tpu.dynamic_rotate %61 by %c241_i32_78 dim 1 : vector<16x256xf32>, i32 -> vector<16x256xf32>
    %c1_79 = arith.constant 1 : index
    %c6_80 = arith.constant 6 : index
    %c0_81 = arith.constant 0 : index
    %c0_82 = arith.constant 0 : index
    %90 = vector.load %arg3[%c1_79, %c6_80, %c0_81, %c0_82] : memref<3x9x16x256xf32, #tpu.memory_space<vmem>>, vector<1x1x16x256xf32>
    %91 = vector.shape_cast %90 : vector<1x1x16x256xf32> to vector<16x256xf32>
    %92 = arith.mulf %89, %91 : vector<16x256xf32>
    %c240_i32_83 = arith.constant 240 : i32
    %93 = tpu.dynamic_rotate %61 by %c240_i32_83 dim 1 : vector<16x256xf32>, i32 -> vector<16x256xf32>
    %c1_84 = arith.constant 1 : index
    %c7_85 = arith.constant 7 : index
    %c0_86 = arith.constant 0 : index
    %c0_87 = arith.constant 0 : index
    %94 = vector.load %arg3[%c1_84, %c7_85, %c0_86, %c0_87] : memref<3x9x16x256xf32, #tpu.memory_space<vmem>>, vector<1x1x16x256xf32>
    %95 = vector.shape_cast %94 : vector<1x1x16x256xf32> to vector<16x256xf32>
    %96 = arith.mulf %93, %95 : vector<16x256xf32>
    %97 = arith.addf %92, %96 : vector<16x256xf32>
    %c239_i32_88 = arith.constant 239 : i32
    %98 = tpu.dynamic_rotate %61 by %c239_i32_88 dim 1 : vector<16x256xf32>, i32 -> vector<16x256xf32>
    %c1_89 = arith.constant 1 : index
    %c8_90 = arith.constant 8 : index
    %c0_91 = arith.constant 0 : index
    %c0_92 = arith.constant 0 : index
    %99 = vector.load %arg3[%c1_89, %c8_90, %c0_91, %c0_92] : memref<3x9x16x256xf32, #tpu.memory_space<vmem>>, vector<1x1x16x256xf32>
    %100 = vector.shape_cast %99 : vector<1x1x16x256xf32> to vector<16x256xf32>
    %101 = arith.mulf %98, %100 : vector<16x256xf32>
    %102 = arith.addf %97, %101 : vector<16x256xf32>
    %103 = arith.addf %75, %102 : vector<16x256xf32>
    %104 = arith.addf %103, %88 : vector<16x256xf32>
    %cst_93 = arith.constant dense<0.000000e+00> : vector<16xf32>
    %105 = vector.multi_reduction <add>, %104, %cst_93 [1] : vector<16x256xf32> to vector<16xf32>
    %106 = vector.shape_cast %105 : vector<16xf32> to vector<16x1xf32>
    %cst_94 = arith.constant 2.560000e+02 : f32
    %107 = vector.broadcast %cst_94 : f32 to vector<16x1xf32>
    %108 = arith.divf %106, %107 : vector<16x1xf32>
    %109 = vector.broadcast %108 : vector<16x1xf32> to vector<16x4xf32>
    %110 = arith.mulf %109, %5 : vector<16x4xf32>
    %cst_95 = arith.constant dense<0.000000e+00> : vector<4xf32>
    %111 = vector.multi_reduction <add>, %110, %cst_95 [0] : vector<16x4xf32> to vector<4xf32>
    %112 = vector.shape_cast %111 : vector<4xf32> to vector<1x4xf32>
    %cst_96 = arith.constant 0.000000e+00 : f32
    %113 = vector.broadcast %cst_96 : f32 to vector<1x4xf32>
    %114 = arith.maximumf %112, %113 : vector<1x4xf32>
    %115 = vector.broadcast %114 : vector<1x4xf32> to vector<16x4xf32>
    %116 = arith.mulf %6, %115 : vector<16x4xf32>
    %cst_97 = arith.constant dense<0.000000e+00> : vector<16xf32>
    %117 = vector.multi_reduction <add>, %116, %cst_97 [1] : vector<16x4xf32> to vector<16xf32>
    %118 = vector.shape_cast %117 : vector<16xf32> to vector<16x1xf32>
    %119 = arith.negf %118 : vector<16x1xf32>
    %120 = math.exp %119 : vector<16x1xf32>
    %cst_98 = arith.constant 1.000000e+00 : f32
    %121 = vector.broadcast %cst_98 : f32 to vector<16x1xf32>
    %122 = arith.addf %121, %120 : vector<16x1xf32>
    %123 = arith.divf %121, %122 : vector<16x1xf32>
    %124 = vector.broadcast %123 : vector<16x1xf32> to vector<16x256xf32>
    %125 = arith.mulf %104, %124 : vector<16x256xf32>
    %126 = vector.broadcast %2 : vector<16x1xf32> to vector<16x256xf32>
    %127 = arith.mulf %125, %126 : vector<16x256xf32>
    %128 = vector.broadcast %3 : vector<16x1xf32> to vector<16x256xf32>
    %129 = arith.addf %127, %128 : vector<16x256xf32>
    %c17_i32_99 = arith.constant 17 : i32
    %130 = tpu.dynamic_rotate %129 by %c17_i32_99 dim 1 : vector<16x256xf32>, i32 -> vector<16x256xf32>
    %c2_100 = arith.constant 2 : index
    %c0_101 = arith.constant 0 : index
    %c0_102 = arith.constant 0 : index
    %c0_103 = arith.constant 0 : index
    %131 = vector.load %arg3[%c2_100, %c0_101, %c0_102, %c0_103] : memref<3x9x16x256xf32, #tpu.memory_space<vmem>>, vector<1x1x16x256xf32>
    %132 = vector.shape_cast %131 : vector<1x1x16x256xf32> to vector<16x256xf32>
    %133 = arith.mulf %130, %132 : vector<16x256xf32>
    %c16_i32_104 = arith.constant 16 : i32
    %134 = tpu.dynamic_rotate %129 by %c16_i32_104 dim 1 : vector<16x256xf32>, i32 -> vector<16x256xf32>
    %c2_105 = arith.constant 2 : index
    %c1_106 = arith.constant 1 : index
    %c0_107 = arith.constant 0 : index
    %c0_108 = arith.constant 0 : index
    %135 = vector.load %arg3[%c2_105, %c1_106, %c0_107, %c0_108] : memref<3x9x16x256xf32, #tpu.memory_space<vmem>>, vector<1x1x16x256xf32>
    %136 = vector.shape_cast %135 : vector<1x1x16x256xf32> to vector<16x256xf32>
    %137 = arith.mulf %134, %136 : vector<16x256xf32>
    %138 = arith.addf %133, %137 : vector<16x256xf32>
    %c15_i32_109 = arith.constant 15 : i32
    %139 = tpu.dynamic_rotate %129 by %c15_i32_109 dim 1 : vector<16x256xf32>, i32 -> vector<16x256xf32>
    %c2_110 = arith.constant 2 : index
    %c2_111 = arith.constant 2 : index
    %c0_112 = arith.constant 0 : index
    %c0_113 = arith.constant 0 : index
    %140 = vector.load %arg3[%c2_110, %c2_111, %c0_112, %c0_113] : memref<3x9x16x256xf32, #tpu.memory_space<vmem>>, vector<1x1x16x256xf32>
    %141 = vector.shape_cast %140 : vector<1x1x16x256xf32> to vector<16x256xf32>
    %142 = arith.mulf %139, %141 : vector<16x256xf32>
    %143 = arith.addf %138, %142 : vector<16x256xf32>
    %c1_i32_114 = arith.constant 1 : i32
    %144 = tpu.dynamic_rotate %129 by %c1_i32_114 dim 1 : vector<16x256xf32>, i32 -> vector<16x256xf32>
    %c2_115 = arith.constant 2 : index
    %c3_116 = arith.constant 3 : index
    %c0_117 = arith.constant 0 : index
    %c0_118 = arith.constant 0 : index
    %145 = vector.load %arg3[%c2_115, %c3_116, %c0_117, %c0_118] : memref<3x9x16x256xf32, #tpu.memory_space<vmem>>, vector<1x1x16x256xf32>
    %146 = vector.shape_cast %145 : vector<1x1x16x256xf32> to vector<16x256xf32>
    %147 = arith.mulf %144, %146 : vector<16x256xf32>
    %c2_119 = arith.constant 2 : index
    %c4_120 = arith.constant 4 : index
    %c0_121 = arith.constant 0 : index
    %c0_122 = arith.constant 0 : index
    %148 = vector.load %arg3[%c2_119, %c4_120, %c0_121, %c0_122] : memref<3x9x16x256xf32, #tpu.memory_space<vmem>>, vector<1x1x16x256xf32>
    %149 = vector.shape_cast %148 : vector<1x1x16x256xf32> to vector<16x256xf32>
    %150 = arith.mulf %129, %149 : vector<16x256xf32>
    %151 = arith.addf %147, %150 : vector<16x256xf32>
    %c255_i32_123 = arith.constant 255 : i32
    %152 = tpu.dynamic_rotate %129 by %c255_i32_123 dim 1 : vector<16x256xf32>, i32 -> vector<16x256xf32>
    %c2_124 = arith.constant 2 : index
    %c5_125 = arith.constant 5 : index
    %c0_126 = arith.constant 0 : index
    %c0_127 = arith.constant 0 : index
    %153 = vector.load %arg3[%c2_124, %c5_125, %c0_126, %c0_127] : memref<3x9x16x256xf32, #tpu.memory_space<vmem>>, vector<1x1x16x256xf32>
    %154 = vector.shape_cast %153 : vector<1x1x16x256xf32> to vector<16x256xf32>
    %155 = arith.mulf %152, %154 : vector<16x256xf32>
    %156 = arith.addf %151, %155 : vector<16x256xf32>
    %c241_i32_128 = arith.constant 241 : i32
    %157 = tpu.dynamic_rotate %129 by %c241_i32_128 dim 1 : vector<16x256xf32>, i32 -> vector<16x256xf32>
    %c2_129 = arith.constant 2 : index
    %c6_130 = arith.constant 6 : index
    %c0_131 = arith.constant 0 : index
    %c0_132 = arith.constant 0 : index
    %158 = vector.load %arg3[%c2_129, %c6_130, %c0_131, %c0_132] : memref<3x9x16x256xf32, #tpu.memory_space<vmem>>, vector<1x1x16x256xf32>
    %159 = vector.shape_cast %158 : vector<1x1x16x256xf32> to vector<16x256xf32>
    %160 = arith.mulf %157, %159 : vector<16x256xf32>
    %c240_i32_133 = arith.constant 240 : i32
    %161 = tpu.dynamic_rotate %129 by %c240_i32_133 dim 1 : vector<16x256xf32>, i32 -> vector<16x256xf32>
    %c2_134 = arith.constant 2 : index
    %c7_135 = arith.constant 7 : index
    %c0_136 = arith.constant 0 : index
    %c0_137 = arith.constant 0 : index
    %162 = vector.load %arg3[%c2_134, %c7_135, %c0_136, %c0_137] : memref<3x9x16x256xf32, #tpu.memory_space<vmem>>, vector<1x1x16x256xf32>
    %163 = vector.shape_cast %162 : vector<1x1x16x256xf32> to vector<16x256xf32>
    %164 = arith.mulf %161, %163 : vector<16x256xf32>
    %165 = arith.addf %160, %164 : vector<16x256xf32>
    %c239_i32_138 = arith.constant 239 : i32
    %166 = tpu.dynamic_rotate %129 by %c239_i32_138 dim 1 : vector<16x256xf32>, i32 -> vector<16x256xf32>
    %c2_139 = arith.constant 2 : index
    %c8_140 = arith.constant 8 : index
    %c0_141 = arith.constant 0 : index
    %c0_142 = arith.constant 0 : index
    %167 = vector.load %arg3[%c2_139, %c8_140, %c0_141, %c0_142] : memref<3x9x16x256xf32, #tpu.memory_space<vmem>>, vector<1x1x16x256xf32>
    %168 = vector.shape_cast %167 : vector<1x1x16x256xf32> to vector<16x256xf32>
    %169 = arith.mulf %166, %168 : vector<16x256xf32>
    %170 = arith.addf %165, %169 : vector<16x256xf32>
    %171 = arith.addf %143, %170 : vector<16x256xf32>
    %172 = arith.addf %171, %156 : vector<16x256xf32>
    %173 = vector.broadcast %4 : vector<16x1xf32> to vector<16x256xf32>
    %174 = arith.addf %172, %173 : vector<16x256xf32>
    %175 = arith.maximumf %129, %174 : vector<16x256xf32>
    %176 = arith.truncf %175 : vector<16x256xf32> to vector<16x256xbf16>
    %cst_143 = arith.constant dense<0.000000e+00> : vector<4x256xf32>
    %177 = tpu.matmul %8, %176, %cst_143 {dimension_numbers = #tpu.dot_dimension_numbers<[1], [0], [0], [1], [0, 0, 1, 1], [], []>} : vector<4x16xbf16>, vector<16x256xbf16>, vector<4x256xf32> -> vector<4x256xf32>
    %178 = arith.addf %11, %177 : vector<4x256xf32>
    %179 = vector.broadcast %9 : vector<4x1xf32> to vector<4x256xf32>
    %180 = arith.addf %178, %179 : vector<4x256xf32>
    %c0_144 = arith.constant 0 : index
    %c0_145 = arith.constant 0 : index
    %c0_146 = arith.constant 0 : index
    %181 = vector.load %arg7[%c0_144, %c0_145, %c0_146] : memref<2x4x256xf32, #tpu.memory_space<vmem>>, vector<1x4x256xf32>
    %182 = vector.shape_cast %181 : vector<1x4x256xf32> to vector<4x256xf32>
    %183 = vector.shape_cast %180 : vector<4x256xf32> to vector<1x4x256xf32>
    tpu.vector_store %arg7[%c0_144, %c0_145, %c0_146], %183 {strides = array<i32>} : memref<2x4x256xf32, #tpu.memory_space<vmem>>, vector<1x4x256xf32>,
    %c1_147 = arith.constant 1 : index
    %c0_148 = arith.constant 0 : index
    %c0_149 = arith.constant 0 : index
    %184 = vector.load %arg1[%c1_147, %c0_148, %c0_149] : memref<2x4x256xf32, #tpu.memory_space<vmem>>, vector<1x4x256xf32>
    %185 = vector.shape_cast %184 : vector<1x4x256xf32> to vector<4x256xf32>
    %186 = arith.truncf %185 : vector<4x256xf32> to vector<4x256xbf16>
    %cst_150 = arith.constant dense<0.000000e+00> : vector<16x256xf32>
    %187 = tpu.matmul %7, %186, %cst_150 {dimension_numbers = #tpu.dot_dimension_numbers<[1], [0], [0], [1], [0, 0, 1, 1], [], []>} : vector<16x4xbf16>, vector<4x256xbf16>, vector<16x256xf32> -> vector<16x256xf32>
    %188 = vector.broadcast %0 : vector<16x1xf32> to vector<16x256xf32>
    %189 = arith.addf %187, %188 : vector<16x256xf32>
    %c17_i32_151 = arith.constant 17 : i32
    %190 = tpu.dynamic_rotate %189 by %c17_i32_151 dim 1 : vector<16x256xf32>, i32 -> vector<16x256xf32>
    %c0_152 = arith.constant 0 : index
    %c0_153 = arith.constant 0 : index
    %c0_154 = arith.constant 0 : index
    %c0_155 = arith.constant 0 : index
    %191 = vector.load %arg3[%c0_152, %c0_153, %c0_154, %c0_155] : memref<3x9x16x256xf32, #tpu.memory_space<vmem>>, vector<1x1x16x256xf32>
    %192 = vector.shape_cast %191 : vector<1x1x16x256xf32> to vector<16x256xf32>
    %193 = arith.mulf %190, %192 : vector<16x256xf32>
    %c16_i32_156 = arith.constant 16 : i32
    %194 = tpu.dynamic_rotate %189 by %c16_i32_156 dim 1 : vector<16x256xf32>, i32 -> vector<16x256xf32>
    %c0_157 = arith.constant 0 : index
    %c1_158 = arith.constant 1 : index
    %c0_159 = arith.constant 0 : index
    %c0_160 = arith.constant 0 : index
    %195 = vector.load %arg3[%c0_157, %c1_158, %c0_159, %c0_160] : memref<3x9x16x256xf32, #tpu.memory_space<vmem>>, vector<1x1x16x256xf32>
    %196 = vector.shape_cast %195 : vector<1x1x16x256xf32> to vector<16x256xf32>
    %197 = arith.mulf %194, %196 : vector<16x256xf32>
    %198 = arith.addf %193, %197 : vector<16x256xf32>
    %c15_i32_161 = arith.constant 15 : i32
    %199 = tpu.dynamic_rotate %189 by %c15_i32_161 dim 1 : vector<16x256xf32>, i32 -> vector<16x256xf32>
    %c0_162 = arith.constant 0 : index
    %c2_163 = arith.constant 2 : index
    %c0_164 = arith.constant 0 : index
    %c0_165 = arith.constant 0 : index
    %200 = vector.load %arg3[%c0_162, %c2_163, %c0_164, %c0_165] : memref<3x9x16x256xf32, #tpu.memory_space<vmem>>, vector<1x1x16x256xf32>
    %201 = vector.shape_cast %200 : vector<1x1x16x256xf32> to vector<16x256xf32>
    %202 = arith.mulf %199, %201 : vector<16x256xf32>
    %203 = arith.addf %198, %202 : vector<16x256xf32>
    %c1_i32_166 = arith.constant 1 : i32
    %204 = tpu.dynamic_rotate %189 by %c1_i32_166 dim 1 : vector<16x256xf32>, i32 -> vector<16x256xf32>
    %c0_167 = arith.constant 0 : index
    %c3_168 = arith.constant 3 : index
    %c0_169 = arith.constant 0 : index
    %c0_170 = arith.constant 0 : index
    %205 = vector.load %arg3[%c0_167, %c3_168, %c0_169, %c0_170] : memref<3x9x16x256xf32, #tpu.memory_space<vmem>>, vector<1x1x16x256xf32>
    %206 = vector.shape_cast %205 : vector<1x1x16x256xf32> to vector<16x256xf32>
    %207 = arith.mulf %204, %206 : vector<16x256xf32>
    %c0_171 = arith.constant 0 : index
    %c4_172 = arith.constant 4 : index
    %c0_173 = arith.constant 0 : index
    %c0_174 = arith.constant 0 : index
    %208 = vector.load %arg3[%c0_171, %c4_172, %c0_173, %c0_174] : memref<3x9x16x256xf32, #tpu.memory_space<vmem>>, vector<1x1x16x256xf32>
    %209 = vector.shape_cast %208 : vector<1x1x16x256xf32> to vector<16x256xf32>
    %210 = arith.mulf %189, %209 : vector<16x256xf32>
    %211 = arith.addf %207, %210 : vector<16x256xf32>
    %c255_i32_175 = arith.constant 255 : i32
    %212 = tpu.dynamic_rotate %189 by %c255_i32_175 dim 1 : vector<16x256xf32>, i32 -> vector<16x256xf32>
    %c0_176 = arith.constant 0 : index
    %c5_177 = arith.constant 5 : index
    %c0_178 = arith.constant 0 : index
    %c0_179 = arith.constant 0 : index
    %213 = vector.load %arg3[%c0_176, %c5_177, %c0_178, %c0_179] : memref<3x9x16x256xf32, #tpu.memory_space<vmem>>, vector<1x1x16x256xf32>
    %214 = vector.shape_cast %213 : vector<1x1x16x256xf32> to vector<16x256xf32>
    %215 = arith.mulf %212, %214 : vector<16x256xf32>
    %216 = arith.addf %211, %215 : vector<16x256xf32>
    %c241_i32_180 = arith.constant 241 : i32
    %217 = tpu.dynamic_rotate %189 by %c241_i32_180 dim 1 : vector<16x256xf32>, i32 -> vector<16x256xf32>
    %c0_181 = arith.constant 0 : index
    %c6_182 = arith.constant 6 : index
    %c0_183 = arith.constant 0 : index
    %c0_184 = arith.constant 0 : index
    %218 = vector.load %arg3[%c0_181, %c6_182, %c0_183, %c0_184] : memref<3x9x16x256xf32, #tpu.memory_space<vmem>>, vector<1x1x16x256xf32>
    %219 = vector.shape_cast %218 : vector<1x1x16x256xf32> to vector<16x256xf32>
    %220 = arith.mulf %217, %219 : vector<16x256xf32>
    %c240_i32_185 = arith.constant 240 : i32
    %221 = tpu.dynamic_rotate %189 by %c240_i32_185 dim 1 : vector<16x256xf32>, i32 -> vector<16x256xf32>
    %c0_186 = arith.constant 0 : index
    %c7_187 = arith.constant 7 : index
    %c0_188 = arith.constant 0 : index
    %c0_189 = arith.constant 0 : index
    %222 = vector.load %arg3[%c0_186, %c7_187, %c0_188, %c0_189] : memref<3x9x16x256xf32, #tpu.memory_space<vmem>>, vector<1x1x16x256xf32>
    %223 = vector.shape_cast %222 : vector<1x1x16x256xf32> to vector<16x256xf32>
    %224 = arith.mulf %221, %223 : vector<16x256xf32>
    %225 = arith.addf %220, %224 : vector<16x256xf32>
    %c239_i32_190 = arith.constant 239 : i32
    %226 = tpu.dynamic_rotate %189 by %c239_i32_190 dim 1 : vector<16x256xf32>, i32 -> vector<16x256xf32>
    %c0_191 = arith.constant 0 : index
    %c8_192 = arith.constant 8 : index
    %c0_193 = arith.constant 0 : index
    %c0_194 = arith.constant 0 : index
    %227 = vector.load %arg3[%c0_191, %c8_192, %c0_193, %c0_194] : memref<3x9x16x256xf32, #tpu.memory_space<vmem>>, vector<1x1x16x256xf32>
    %228 = vector.shape_cast %227 : vector<1x1x16x256xf32> to vector<16x256xf32>
    %229 = arith.mulf %226, %228 : vector<16x256xf32>
    %230 = arith.addf %225, %229 : vector<16x256xf32>
    %231 = arith.addf %203, %230 : vector<16x256xf32>
    %232 = arith.addf %231, %216 : vector<16x256xf32>
    %233 = vector.broadcast %1 : vector<16x1xf32> to vector<16x256xf32>
    %234 = arith.addf %232, %233 : vector<16x256xf32>
    %235 = arith.maximumf %189, %234 : vector<16x256xf32>
    %c17_i32_195 = arith.constant 17 : i32
    %236 = tpu.dynamic_rotate %235 by %c17_i32_195 dim 1 : vector<16x256xf32>, i32 -> vector<16x256xf32>
    %c1_196 = arith.constant 1 : index
    %c0_197 = arith.constant 0 : index
    %c0_198 = arith.constant 0 : index
    %c0_199 = arith.constant 0 : index
    %237 = vector.load %arg3[%c1_196, %c0_197, %c0_198, %c0_199] : memref<3x9x16x256xf32, #tpu.memory_space<vmem>>, vector<1x1x16x256xf32>
    %238 = vector.shape_cast %237 : vector<1x1x16x256xf32> to vector<16x256xf32>
    %239 = arith.mulf %236, %238 : vector<16x256xf32>
    %c16_i32_200 = arith.constant 16 : i32
    %240 = tpu.dynamic_rotate %235 by %c16_i32_200 dim 1 : vector<16x256xf32>, i32 -> vector<16x256xf32>
    %c1_201 = arith.constant 1 : index
    %c1_202 = arith.constant 1 : index
    %c0_203 = arith.constant 0 : index
    %c0_204 = arith.constant 0 : index
    %241 = vector.load %arg3[%c1_201, %c1_202, %c0_203, %c0_204] : memref<3x9x16x256xf32, #tpu.memory_space<vmem>>, vector<1x1x16x256xf32>
    %242 = vector.shape_cast %241 : vector<1x1x16x256xf32> to vector<16x256xf32>
    %243 = arith.mulf %240, %242 : vector<16x256xf32>
    %244 = arith.addf %239, %243 : vector<16x256xf32>
    %c15_i32_205 = arith.constant 15 : i32
    %245 = tpu.dynamic_rotate %235 by %c15_i32_205 dim 1 : vector<16x256xf32>, i32 -> vector<16x256xf32>
    %c1_206 = arith.constant 1 : index
    %c2_207 = arith.constant 2 : index
    %c0_208 = arith.constant 0 : index
    %c0_209 = arith.constant 0 : index
    %246 = vector.load %arg3[%c1_206, %c2_207, %c0_208, %c0_209] : memref<3x9x16x256xf32, #tpu.memory_space<vmem>>, vector<1x1x16x256xf32>
    %247 = vector.shape_cast %246 : vector<1x1x16x256xf32> to vector<16x256xf32>
    %248 = arith.mulf %245, %247 : vector<16x256xf32>
    %249 = arith.addf %244, %248 : vector<16x256xf32>
    %c1_i32_210 = arith.constant 1 : i32
    %250 = tpu.dynamic_rotate %235 by %c1_i32_210 dim 1 : vector<16x256xf32>, i32 -> vector<16x256xf32>
    %c1_211 = arith.constant 1 : index
    %c3_212 = arith.constant 3 : index
    %c0_213 = arith.constant 0 : index
    %c0_214 = arith.constant 0 : index
    %251 = vector.load %arg3[%c1_211, %c3_212, %c0_213, %c0_214] : memref<3x9x16x256xf32, #tpu.memory_space<vmem>>, vector<1x1x16x256xf32>
    %252 = vector.shape_cast %251 : vector<1x1x16x256xf32> to vector<16x256xf32>
    %253 = arith.mulf %250, %252 : vector<16x256xf32>
    %c1_215 = arith.constant 1 : index
    %c4_216 = arith.constant 4 : index
    %c0_217 = arith.constant 0 : index
    %c0_218 = arith.constant 0 : index
    %254 = vector.load %arg3[%c1_215, %c4_216, %c0_217, %c0_218] : memref<3x9x16x256xf32, #tpu.memory_space<vmem>>, vector<1x1x16x256xf32>
    %255 = vector.shape_cast %254 : vector<1x1x16x256xf32> to vector<16x256xf32>
    %256 = arith.mulf %235, %255 : vector<16x256xf32>
    %257 = arith.addf %253, %256 : vector<16x256xf32>
    %c255_i32_219 = arith.constant 255 : i32
    %258 = tpu.dynamic_rotate %235 by %c255_i32_219 dim 1 : vector<16x256xf32>, i32 -> vector<16x256xf32>
    %c1_220 = arith.constant 1 : index
    %c5_221 = arith.constant 5 : index
    %c0_222 = arith.constant 0 : index
    %c0_223 = arith.constant 0 : index
    %259 = vector.load %arg3[%c1_220, %c5_221, %c0_222, %c0_223] : memref<3x9x16x256xf32, #tpu.memory_space<vmem>>, vector<1x1x16x256xf32>
    %260 = vector.shape_cast %259 : vector<1x1x16x256xf32> to vector<16x256xf32>
    %261 = arith.mulf %258, %260 : vector<16x256xf32>
    %262 = arith.addf %257, %261 : vector<16x256xf32>
    %c241_i32_224 = arith.constant 241 : i32
    %263 = tpu.dynamic_rotate %235 by %c241_i32_224 dim 1 : vector<16x256xf32>, i32 -> vector<16x256xf32>
    %c1_225 = arith.constant 1 : index
    %c6_226 = arith.constant 6 : index
    %c0_227 = arith.constant 0 : index
    %c0_228 = arith.constant 0 : index
    %264 = vector.load %arg3[%c1_225, %c6_226, %c0_227, %c0_228] : memref<3x9x16x256xf32, #tpu.memory_space<vmem>>, vector<1x1x16x256xf32>
    %265 = vector.shape_cast %264 : vector<1x1x16x256xf32> to vector<16x256xf32>
    %266 = arith.mulf %263, %265 : vector<16x256xf32>
    %c240_i32_229 = arith.constant 240 : i32
    %267 = tpu.dynamic_rotate %235 by %c240_i32_229 dim 1 : vector<16x256xf32>, i32 -> vector<16x256xf32>
    %c1_230 = arith.constant 1 : index
    %c7_231 = arith.constant 7 : index
    %c0_232 = arith.constant 0 : index
    %c0_233 = arith.constant 0 : index
    %268 = vector.load %arg3[%c1_230, %c7_231, %c0_232, %c0_233] : memref<3x9x16x256xf32, #tpu.memory_space<vmem>>, vector<1x1x16x256xf32>
    %269 = vector.shape_cast %268 : vector<1x1x16x256xf32> to vector<16x256xf32>
    %270 = arith.mulf %267, %269 : vector<16x256xf32>
    %271 = arith.addf %266, %270 : vector<16x256xf32>
    %c239_i32_234 = arith.constant 239 : i32
    %272 = tpu.dynamic_rotate %235 by %c239_i32_234 dim 1 : vector<16x256xf32>, i32 -> vector<16x256xf32>
    %c1_235 = arith.constant 1 : index
    %c8_236 = arith.constant 8 : index
    %c0_237 = arith.constant 0 : index
    %c0_238 = arith.constant 0 : index
    %273 = vector.load %arg3[%c1_235, %c8_236, %c0_237, %c0_238] : memref<3x9x16x256xf32, #tpu.memory_space<vmem>>, vector<1x1x16x256xf32>
    %274 = vector.shape_cast %273 : vector<1x1x16x256xf32> to vector<16x256xf32>
    %275 = arith.mulf %272, %274 : vector<16x256xf32>
    %276 = arith.addf %271, %275 : vector<16x256xf32>
    %277 = arith.addf %249, %276 : vector<16x256xf32>
    %278 = arith.addf %277, %262 : vector<16x256xf32>
    %cst_239 = arith.constant dense<0.000000e+00> : vector<16xf32>
    %279 = vector.multi_reduction <add>, %278, %cst_239 [1] : vector<16x256xf32> to vector<16xf32>
    %280 = vector.shape_cast %279 : vector<16xf32> to vector<16x1xf32>
    %cst_240 = arith.constant 2.560000e+02 : f32
    %281 = vector.broadcast %cst_240 : f32 to vector<16x1xf32>
    %282 = arith.divf %280, %281 : vector<16x1xf32>
    %283 = vector.broadcast %282 : vector<16x1xf32> to vector<16x4xf32>
    %284 = arith.mulf %283, %5 : vector<16x4xf32>
    %cst_241 = arith.constant dense<0.000000e+00> : vector<4xf32>
    %285 = vector.multi_reduction <add>, %284, %cst_241 [0] : vector<16x4xf32> to vector<4xf32>
    %286 = vector.shape_cast %285 : vector<4xf32> to vector<1x4xf32>
    %cst_242 = arith.constant 0.000000e+00 : f32
    %287 = vector.broadcast %cst_242 : f32 to vector<1x4xf32>
    %288 = arith.maximumf %286, %287 : vector<1x4xf32>
    %289 = vector.broadcast %288 : vector<1x4xf32> to vector<16x4xf32>
    %290 = arith.mulf %6, %289 : vector<16x4xf32>
    %cst_243 = arith.constant dense<0.000000e+00> : vector<16xf32>
    %291 = vector.multi_reduction <add>, %290, %cst_243 [1] : vector<16x4xf32> to vector<16xf32>
    %292 = vector.shape_cast %291 : vector<16xf32> to vector<16x1xf32>
    %293 = arith.negf %292 : vector<16x1xf32>
    %294 = math.exp %293 : vector<16x1xf32>
    %cst_244 = arith.constant 1.000000e+00 : f32
    %295 = vector.broadcast %cst_244 : f32 to vector<16x1xf32>
    %296 = arith.addf %295, %294 : vector<16x1xf32>
    %297 = arith.divf %295, %296 : vector<16x1xf32>
    %298 = vector.broadcast %297 : vector<16x1xf32> to vector<16x256xf32>
    %299 = arith.mulf %278, %298 : vector<16x256xf32>
    %300 = vector.broadcast %2 : vector<16x1xf32> to vector<16x256xf32>
    %301 = arith.mulf %299, %300 : vector<16x256xf32>
    %302 = vector.broadcast %3 : vector<16x1xf32> to vector<16x256xf32>
    %303 = arith.addf %301, %302 : vector<16x256xf32>
    %c17_i32_245 = arith.constant 17 : i32
    %304 = tpu.dynamic_rotate %303 by %c17_i32_245 dim 1 : vector<16x256xf32>, i32 -> vector<16x256xf32>
    %c2_246 = arith.constant 2 : index
    %c0_247 = arith.constant 0 : index
    %c0_248 = arith.constant 0 : index
    %c0_249 = arith.constant 0 : index
    %305 = vector.load %arg3[%c2_246, %c0_247, %c0_248, %c0_249] : memref<3x9x16x256xf32, #tpu.memory_space<vmem>>, vector<1x1x16x256xf32>
    %306 = vector.shape_cast %305 : vector<1x1x16x256xf32> to vector<16x256xf32>
    %307 = arith.mulf %304, %306 : vector<16x256xf32>
    %c16_i32_250 = arith.constant 16 : i32
    %308 = tpu.dynamic_rotate %303 by %c16_i32_250 dim 1 : vector<16x256xf32>, i32 -> vector<16x256xf32>
    %c2_251 = arith.constant 2 : index
    %c1_252 = arith.constant 1 : index
    %c0_253 = arith.constant 0 : index
    %c0_254 = arith.constant 0 : index
    %309 = vector.load %arg3[%c2_251, %c1_252, %c0_253, %c0_254] : memref<3x9x16x256xf32, #tpu.memory_space<vmem>>, vector<1x1x16x256xf32>
    %310 = vector.shape_cast %309 : vector<1x1x16x256xf32> to vector<16x256xf32>
    %311 = arith.mulf %308, %310 : vector<16x256xf32>
    %312 = arith.addf %307, %311 : vector<16x256xf32>
    %c15_i32_255 = arith.constant 15 : i32
    %313 = tpu.dynamic_rotate %303 by %c15_i32_255 dim 1 : vector<16x256xf32>, i32 -> vector<16x256xf32>
    %c2_256 = arith.constant 2 : index
    %c2_257 = arith.constant 2 : index
    %c0_258 = arith.constant 0 : index
    %c0_259 = arith.constant 0 : index
    %314 = vector.load %arg3[%c2_256, %c2_257, %c0_258, %c0_259] : memref<3x9x16x256xf32, #tpu.memory_space<vmem>>, vector<1x1x16x256xf32>
    %315 = vector.shape_cast %314 : vector<1x1x16x256xf32> to vector<16x256xf32>
    %316 = arith.mulf %313, %315 : vector<16x256xf32>
    %317 = arith.addf %312, %316 : vector<16x256xf32>
    %c1_i32_260 = arith.constant 1 : i32
    %318 = tpu.dynamic_rotate %303 by %c1_i32_260 dim 1 : vector<16x256xf32>, i32 -> vector<16x256xf32>
    %c2_261 = arith.constant 2 : index
    %c3_262 = arith.constant 3 : index
    %c0_263 = arith.constant 0 : index
    %c0_264 = arith.constant 0 : index
    %319 = vector.load %arg3[%c2_261, %c3_262, %c0_263, %c0_264] : memref<3x9x16x256xf32, #tpu.memory_space<vmem>>, vector<1x1x16x256xf32>
    %320 = vector.shape_cast %319 : vector<1x1x16x256xf32> to vector<16x256xf32>
    %321 = arith.mulf %318, %320 : vector<16x256xf32>
    %c2_265 = arith.constant 2 : index
    %c4_266 = arith.constant 4 : index
    %c0_267 = arith.constant 0 : index
    %c0_268 = arith.constant 0 : index
    %322 = vector.load %arg3[%c2_265, %c4_266, %c0_267, %c0_268] : memref<3x9x16x256xf32, #tpu.memory_space<vmem>>, vector<1x1x16x256xf32>
    %323 = vector.shape_cast %322 : vector<1x1x16x256xf32> to vector<16x256xf32>
    %324 = arith.mulf %303, %323 : vector<16x256xf32>
    %325 = arith.addf %321, %324 : vector<16x256xf32>
    %c255_i32_269 = arith.constant 255 : i32
    %326 = tpu.dynamic_rotate %303 by %c255_i32_269 dim 1 : vector<16x256xf32>, i32 -> vector<16x256xf32>
    %c2_270 = arith.constant 2 : index
    %c5_271 = arith.constant 5 : index
    %c0_272 = arith.constant 0 : index
    %c0_273 = arith.constant 0 : index
    %327 = vector.load %arg3[%c2_270, %c5_271, %c0_272, %c0_273] : memref<3x9x16x256xf32, #tpu.memory_space<vmem>>, vector<1x1x16x256xf32>
    %328 = vector.shape_cast %327 : vector<1x1x16x256xf32> to vector<16x256xf32>
    %329 = arith.mulf %326, %328 : vector<16x256xf32>
    %330 = arith.addf %325, %329 : vector<16x256xf32>
    %c241_i32_274 = arith.constant 241 : i32
    %331 = tpu.dynamic_rotate %303 by %c241_i32_274 dim 1 : vector<16x256xf32>, i32 -> vector<16x256xf32>
    %c2_275 = arith.constant 2 : index
    %c6_276 = arith.constant 6 : index
    %c0_277 = arith.constant 0 : index
    %c0_278 = arith.constant 0 : index
    %332 = vector.load %arg3[%c2_275, %c6_276, %c0_277, %c0_278] : memref<3x9x16x256xf32, #tpu.memory_space<vmem>>, vector<1x1x16x256xf32>
    %333 = vector.shape_cast %332 : vector<1x1x16x256xf32> to vector<16x256xf32>
    %334 = arith.mulf %331, %333 : vector<16x256xf32>
    %c240_i32_279 = arith.constant 240 : i32
    %335 = tpu.dynamic_rotate %303 by %c240_i32_279 dim 1 : vector<16x256xf32>, i32 -> vector<16x256xf32>
    %c2_280 = arith.constant 2 : index
    %c7_281 = arith.constant 7 : index
    %c0_282 = arith.constant 0 : index
    %c0_283 = arith.constant 0 : index
    %336 = vector.load %arg3[%c2_280, %c7_281, %c0_282, %c0_283] : memref<3x9x16x256xf32, #tpu.memory_space<vmem>>, vector<1x1x16x256xf32>
    %337 = vector.shape_cast %336 : vector<1x1x16x256xf32> to vector<16x256xf32>
    %338 = arith.mulf %335, %337 : vector<16x256xf32>
    %339 = arith.addf %334, %338 : vector<16x256xf32>
    %c239_i32_284 = arith.constant 239 : i32
    %340 = tpu.dynamic_rotate %303 by %c239_i32_284 dim 1 : vector<16x256xf32>, i32 -> vector<16x256xf32>
    %c2_285 = arith.constant 2 : index
    %c8_286 = arith.constant 8 : index
    %c0_287 = arith.constant 0 : index
    %c0_288 = arith.constant 0 : index
    %341 = vector.load %arg3[%c2_285, %c8_286, %c0_287, %c0_288] : memref<3x9x16x256xf32, #tpu.memory_space<vmem>>, vector<1x1x16x256xf32>
    %342 = vector.shape_cast %341 : vector<1x1x16x256xf32> to vector<16x256xf32>
    %343 = arith.mulf %340, %342 : vector<16x256xf32>
    %344 = arith.addf %339, %343 : vector<16x256xf32>
    %345 = arith.addf %317, %344 : vector<16x256xf32>
    %346 = arith.addf %345, %330 : vector<16x256xf32>
    %347 = vector.broadcast %4 : vector<16x1xf32> to vector<16x256xf32>
    %348 = arith.addf %346, %347 : vector<16x256xf32>
    %349 = arith.maximumf %303, %348 : vector<16x256xf32>
    %350 = arith.truncf %349 : vector<16x256xf32> to vector<16x256xbf16>
    %cst_289 = arith.constant dense<0.000000e+00> : vector<4x256xf32>
    %351 = tpu.matmul %8, %350, %cst_289 {dimension_numbers = #tpu.dot_dimension_numbers<[1], [0], [0], [1], [0, 0, 1, 1], [], []>} : vector<4x16xbf16>, vector<16x256xbf16>, vector<4x256xf32> -> vector<4x256xf32>
    %352 = arith.addf %185, %351 : vector<4x256xf32>
    %353 = vector.broadcast %9 : vector<4x1xf32> to vector<4x256xf32>
    %354 = arith.addf %352, %353 : vector<4x256xf32>
    %c1_290 = arith.constant 1 : index
    %c0_291 = arith.constant 0 : index
    %c0_292 = arith.constant 0 : index
    %355 = vector.load %arg7[%c1_290, %c0_291, %c0_292] : memref<2x4x256xf32, #tpu.memory_space<vmem>>, vector<1x4x256xf32>
    %356 = vector.shape_cast %355 : vector<1x4x256xf32> to vector<4x256xf32>
    %357 = vector.shape_cast %354 : vector<4x256xf32> to vector<1x4x256xf32>
    tpu.vector_store %arg7[%c1_290, %c0_291, %c0_292], %357 {strides = array<i32>} : memref<2x4x256xf32, #tpu.memory_space<vmem>>, vector<1x4x256xf32>,
    return
  }
  func.func @transform_0(%arg0: i32) -> (i32, i32, i32) {
    %c0_i32 = arith.constant 0 : i32
    %c0_i32_0 = arith.constant 0 : i32
    %c0_i32_1 = arith.constant 0 : i32
    return %arg0, %c0_i32, %c0_i32_0 : i32, i32, i32
  }
  func.func @transform_1(%arg0: i32) -> (i32, i32) {
    %c0_i32 = arith.constant 0 : i32
    %c0_i32_0 = arith.constant 0 : i32
    %c0_i32_1 = arith.constant 0 : i32
    return %c0_i32, %c0_i32_0 : i32, i32
  }
  func.func @transform_2(%arg0: i32) -> (i32, i32, i32, i32) {
    %c0_i32 = arith.constant 0 : i32
    %c0_i32_0 = arith.constant 0 : i32
    %c0_i32_1 = arith.constant 0 : i32
    %c0_i32_2 = arith.constant 0 : i32
    %c0_i32_3 = arith.constant 0 : i32
    return %c0_i32, %c0_i32_0, %c0_i32_1, %c0_i32_2 : i32, i32, i32, i32
  }
  func.func @transform_3(%arg0: i32) -> (i32, i32) {
    %c0_i32 = arith.constant 0 : i32
    %c0_i32_0 = arith.constant 0 : i32
    %c0_i32_1 = arith.constant 0 : i32
    return %c0_i32, %c0_i32_0 : i32, i32
  }
  func.func @transform_4(%arg0: i32) -> (i32, i32) {
    %c0_i32 = arith.constant 0 : i32
    %c0_i32_0 = arith.constant 0 : i32
    %c0_i32_1 = arith.constant 0 : i32
    return %c0_i32, %c0_i32_0 : i32, i32
  }
  func.func @transform_5(%arg0: i32) -> (i32, i32) {
    %c0_i32 = arith.constant 0 : i32
    %c0_i32_0 = arith.constant 0 : i32
    %c0_i32_1 = arith.constant 0 : i32
    return %c0_i32, %c0_i32_0 : i32, i32
  }
  func.func @transform_6(%arg0: i32) -> (i32, i32, i32) {
    %c0_i32 = arith.constant 0 : i32
    %c0_i32_0 = arith.constant 0 : i32
    %c0_i32_1 = arith.constant 0 : i32
    return %arg0, %c0_i32, %c0_i32_0 : i32, i32, i32
  }
}

</mosaic_0001>

<llo_original>
// kernel: tpu_custom_call.1
$region0: #{tpu_custom_call.1}
  #allocation0 [shape = 'u32[]', space=smem, size = 0x4, offset = 0x4, fixed_abs, tag = 'smem constant byte address 0x4 - core index']
  #allocation1 [shape = 'u32[144,128]{1,0:T(1,128)}', space=vmem, size = 0x12000, scoped, tag = 'internal scratch']
  %s0 = inlined_call_operand.hbm [shape: f32[4,4,256], index: 0, kind: input, shape index: {}]
  %s1 = inlined_call_operand.vmem [shape: bf16[16,4], index: 1, kind: input, shape index: {}]
  %s2 = inlined_call_operand.hbm [shape: f32[3,9,16,256], index: 2, kind: input, shape index: {}]
  %s3 = inlined_call_operand.vmem [shape: f32[16,13], index: 3, kind: input, shape index: {}]
  %s4 = inlined_call_operand.vmem [shape: bf16[4,16], index: 4, kind: input, shape index: {}]
  %s5 = inlined_call_operand.vmem [shape: f32[4,1], index: 5, kind: input, shape index: {}]
  %s6 = inlined_call_operand.hbm [shape: f32[4,4,256], index: 6, kind: output, shape index: {}]
  %s7 = sld [smem:[#allocation0]]
  $region65: #{tpu_custom_call.1} parent=0
    _
  %s9 = ssub.s32 1, %s7
  %s10 = scalar_select 0, %s9, %s7
  $region1: #{tpu_custom_call.1} parent=0
    #allocation2 [shape = 'u8[16384]{0}', space=vmem, size = 0x4000, scoped, tag = 'input window, operand 0']
    #allocation3 [shape = 's32[2]{0}', space=sflag, size = 0x8, scoped, tag = 'scoped memory for tpu_custom_call.1']
    #allocation4 [shape = 's32[2]{0}', space=sflag, size = 0x8, scoped, tag = 'scoped memory for tpu_custom_call.1']
    #allocation5 [shape = 'u8[442368]{0}', space=vmem, size = 0x6c000, scoped, tag = 'input window, operand 2, single buffered']
    #allocation6 [shape = 's32[1]{0}', space=sflag, size = 0x4, scoped, tag = 'scoped memory for tpu_custom_call.1']
    #allocation7 [shape = 'u8[16384]{0}', space=vmem, size = 0x4000, scoped, tag = 'output window, operand 0']
    %11 = vsyncpa [#allocation3], 0
    %s12 = scalar_lea.sflag [#allocation3], 1
    %13 = vsyncpa %s12, 0
    %14 = vsyncpa [#allocation6], 0
    %15 = vsyncpa [#allocation4], 0
    %s16 = scalar_lea.sflag [#allocation4], 1
    %17 = vsyncpa %s16, 0
    loop: start=0, step=1, limit=4
    $region2: #{tpu_custom_call.1} parent=1 // loop_pre_header
      _
    $region3: #{tpu_custom_call.1} parent=1 // loop_header
      %s19 = sphi 0, %s23
      %p20 = scmp.ge.s32.totalorder %s19, 4
      %s29 = sphi 0, %s31
      %s32 = sphi 0, %s29
      %s33 = sphi 0, %s32
      %s49 = sphi 0, %s33
      %s53 = sphi 0, %s53
      %s55 = sphi 0, %s53
      %s56 = sphi 0, %s55
      %s70 = sphi 0, %s56
      %s74 = sphi 0, %s74
      %s76 = sphi 0, %s74
      %s77 = sphi 0, %s76
      %s91 = sphi 0, %s77
      %s95 = sphi 0, %s95
      %s97 = sphi 0, %s95
      %s98 = sphi 0, %s97
      %s112 = sphi 0, %s98
      %s116 = sphi 0, %s116
      %s118 = sphi 0, %s116
      %s119 = sphi 0, %s118
      %s133 = sphi 0, %s119
      %s137 = sphi 0, %s137
      %s139 = sphi 0, %s137
      %s140 = sphi 0, %s139
      %s154 = sphi 0, %s140
      %s160 = sphi 0, %s162
      %s163 = sphi 0, %s160
      %s164 = sphi 0, %s163
      %s180 = sphi 0, %s164
    $region4: #{tpu_custom_call.1} parent=1 // loop_header_branch
      %22 = sbr.rel (%p20) target = $region8
    $region5: #{tpu_custom_call.1} parent=1 // loop_body
      %s24 = ssub.s32 %s19, 1
      %s25 = ssub.s32 %s19, 2
      %s26 = sadd.s32 %s19, 1
      %s27 = ssub.s32 %s19, %s26
      %p28 = scmp.eq.s32.totalorder %s27, 0
      %s30 = sadd.s32 %s29, 1
      %s31 = scalar_select %p28, %s29, %s30
      %p34 = pneg %p28
      %p35 = scmp.eq.s32.totalorder %s19, 1
      %p36 = por %p34, %p35
      %p37 = scmp.ne.s32.totalorder %s29, %s32
      %p38 = scmp.eq.s32.totalorder %s19, 0
      %p39 = por %p37, %p38
      %p40 = scmp.ne.s32.totalorder %s29, %s32
      %p41 = scmp.eq.s32.totalorder %s24, 1
      %p42 = por %p40, %p41
      %p43 = scmp.ne.s32.totalorder %s32, %s33
      %p44 = scmp.eq.s32.totalorder %s24, 0
      %p45 = por %p43, %p44
      %p46 = scmp.ne.s32.totalorder %s32, %s33
      %p47 = scmp.eq.s32.totalorder %s25, 1
      %p48 = por %p46, %p47
      %p50 = scmp.ne.s32.totalorder %s33, %s49
      %p51 = scmp.eq.s32.totalorder %s25, 0
      %p52 = por %p50, %p51
      %s54 = sadd.s32 %s53, 1
      %p57 = scmp.eq.s32.totalorder %s19, 1
      %p58 = scmp.ne.s32.totalorder %s53, %s55
      %p59 = scmp.eq.s32.totalorder %s19, 0
      %p60 = por %p58, %p59
      %p61 = scmp.ne.s32.totalorder %s53, %s55
      %p62 = scmp.eq.s32.totalorder %s24, 1
      %p63 = por %p61, %p62
      %p64 = scmp.ne.s32.totalorder %s55, %s56
      %p65 = scmp.eq.s32.totalorder %s24, 0
      %p66 = por %p64, %p65
      %p67 = scmp.ne.s32.totalorder %s55, %s56
      %p68 = scmp.eq.s32.totalorder %s25, 1
      %p69 = por %p67, %p68
      %p71 = scmp.ne.s32.totalorder %s56, %s70
      %p72 = scmp.eq.s32.totalorder %s25, 0
      %p73 = por %p71, %p72
      %s75 = sadd.s32 %s74, 1
      %p78 = scmp.eq.s32.totalorder %s19, 1
      %p79 = scmp.ne.s32.totalorder %s74, %s76
      %p80 = scmp.eq.s32.totalorder %s19, 0
      %p81 = por %p79, %p80
      %p82 = scmp.ne.s32.totalorder %s74, %s76
      %p83 = scmp.eq.s32.totalorder %s24, 1
      %p84 = por %p82, %p83
      %p85 = scmp.ne.s32.totalorder %s76, %s77
      %p86 = scmp.eq.s32.totalorder %s24, 0
      %p87 = por %p85, %p86
      %p88 = scmp.ne.s32.totalorder %s76, %s77
      %p89 = scmp.eq.s32.totalorder %s25, 1
      %p90 = por %p88, %p89
      %p92 = scmp.ne.s32.totalorder %s77, %s91
      %p93 = scmp.eq.s32.totalorder %s25, 0
      %p94 = por %p92, %p93
      %s96 = sadd.s32 %s95, 1
      %p99 = scmp.eq.s32.totalorder %s19, 1
      %p100 = scmp.ne.s32.totalorder %s95, %s97
      %p101 = scmp.eq.s32.totalorder %s19, 0
      %p102 = por %p100, %p101
      %p103 = scmp.ne.s32.totalorder %s95, %s97
      %p104 = scmp.eq.s32.totalorder %s24, 1
      %p105 = por %p103, %p104
      %p106 = scmp.ne.s32.totalorder %s97, %s98
      %p107 = scmp.eq.s32.totalorder %s24, 0
      %p108 = por %p106, %p107
      %p109 = scmp.ne.s32.totalorder %s97, %s98
      %p110 = scmp.eq.s32.totalorder %s25, 1
      %p111 = por %p109, %p110
      %p113 = scmp.ne.s32.totalorder %s98, %s112
      %p114 = scmp.eq.s32.totalorder %s25, 0
      %p115 = por %p113, %p114
      %s117 = sadd.s32 %s116, 1
      %p120 = scmp.eq.s32.totalorder %s19, 1
      %p121 = scmp.ne.s32.totalorder %s116, %s118
      %p122 = scmp.eq.s32.totalorder %s19, 0
      %p123 = por %p121, %p122
      %p124 = scmp.ne.s32.totalorder %s116, %s118
      %p125 = scmp.eq.s32.totalorder %s24, 1
      %p126 = por %p124, %p125
      %p127 = scmp.ne.s32.totalorder %s118, %s119
      %p128 = scmp.eq.s32.totalorder %s24, 0
      %p129 = por %p127, %p128
      %p130 = scmp.ne.s32.totalorder %s118, %s119
      %p131 = scmp.eq.s32.totalorder %s25, 1
      %p132 = por %p130, %p131
      %p134 = scmp.ne.s32.totalorder %s119, %s133
      %p135 = scmp.eq.s32.totalorder %s25, 0
      %p136 = por %p134, %p135
      %s138 = sadd.s32 %s137, 1
      %p141 = scmp.eq.s32.totalorder %s19, 1
      %p142 = scmp.ne.s32.totalorder %s137, %s139
      %p143 = scmp.eq.s32.totalorder %s19, 0
      %p144 = por %p142, %p143
      %p145 = scmp.ne.s32.totalorder %s137, %s139
      %p146 = scmp.eq.s32.totalorder %s24, 1
      %p147 = por %p145, %p146
      %p148 = scmp.ne.s32.totalorder %s139, %s140
      %p149 = scmp.eq.s32.totalorder %s24, 0
      %p150 = por %p148, %p149
      %p151 = scmp.ne.s32.totalorder %s139, %s140
      %p152 = scmp.eq.s32.totalorder %s25, 1
      %p153 = por %p151, %p152
      %p155 = scmp.ne.s32.totalorder %s140, %s154
      %p156 = scmp.eq.s32.totalorder %s25, 0
      %p157 = por %p155, %p156
      %s158 = ssub.s32 %s19, %s26
      %p159 = scmp.eq.s32.totalorder %s158, 0
      %s161 = sadd.s32 %s160, 1
      %s162 = scalar_select %p159, %s160, %s161
      %p165 = pneg %p159
      %p166 = scmp.eq.s32.totalorder %s19, 1
      %p167 = por %p165, %p166
      %p168 = scmp.ne.s32.totalorder %s160, %s163
      %p169 = scmp.eq.s32.totalorder %s19, 0
      %p170 = por %p168, %p169
      %p171 = scmp.ne.s32.totalorder %s160, %s163
      %p172 = scmp.eq.s32.totalorder %s24, 1
      %p173 = por %p171, %p172
      %p174 = scmp.ne.s32.totalorder %s163, %s164
      %p175 = scmp.eq.s32.totalorder %s24, 0
      %p176 = por %p174, %p175
      %p177 = scmp.ne.s32.totalorder %s163, %s164
      %p178 = scmp.eq.s32.totalorder %s25, 1
      %p179 = por %p177, %p178
      %p181 = scmp.ne.s32.totalorder %s164, %s180
      %p182 = scmp.eq.s32.totalorder %s25, 0
      %p183 = por %p181, %p182
      %p184 = scmp.le.s32.totalorder 1, %s19
      %p185 = scmp.lt.s32.totalorder %s19, 3
      %p186 = pnand %p184, %p185
      %p187 = pneg %p186
      // Predicated region
      $region9: #{tpu_custom_call.1} parent=5 // pred_check
        _
      $region10: #{tpu_custom_call.1} parent=5 // pred_check_branch
        %189 = sbr.rel (%p186) target = $region12
      $region11: #{tpu_custom_call.1} parent=5 // pred_region
        %s190 = ssub.s32 %s19, 1
        // Predicated region
        $region13: #{tpu_custom_call.1} parent=11 // pred_check
          %p191 = pneg %p66
        $region14: #{tpu_custom_call.1} parent=11 // pred_check_branch
          %193 = sbr.rel (%p191) target = $region16
        $region15: #{tpu_custom_call.1} parent=11 // pred_region
          _
        $region16: #{tpu_custom_call.1} parent=11 // pred_fallthru
          _
        // Predicated region
        $region17: #{tpu_custom_call.1} parent=11 // pred_check
          %p194 = pneg %p87
        $region18: #{tpu_custom_call.1} parent=11 // pred_check_branch
          %196 = sbr.rel (%p194) target = $region20
        $region19: #{tpu_custom_call.1} parent=11 // pred_region
          %s198 = ssub.s32 13824, 13824
          %199 = vsyncadd [#allocation6], %s198
          %s200 = sshll.u32 [#allocation5], 4
          %s201 = int_to_ptr.vmem [resolvable:$true] %s200
          %206 = dma.hbm_to_vmem [thread:$0]  %s2, 13824, %s201, [#allocation6], 256, 256, 16
        $region20: #{tpu_custom_call.1} parent=11 // pred_fallthru
          _
        // Predicated region
        $region21: #{tpu_custom_call.1} parent=11 // pred_check
          %p207 = pneg %p108
        $region22: #{tpu_custom_call.1} parent=11 // pred_check_branch
          %209 = sbr.rel (%p207) target = $region24
        $region23: #{tpu_custom_call.1} parent=11 // pred_region
          _
        $region24: #{tpu_custom_call.1} parent=11 // pred_fallthru
          _
        // Predicated region
        $region25: #{tpu_custom_call.1} parent=11 // pred_check
          %p210 = pneg %p129
        $region26: #{tpu_custom_call.1} parent=11 // pred_check_branch
          %212 = sbr.rel (%p210) target = $region28
        $region27: #{tpu_custom_call.1} parent=11 // pred_region
          _
        $region28: #{tpu_custom_call.1} parent=11 // pred_fallthru
          _
        // Predicated region
        $region29: #{tpu_custom_call.1} parent=11 // pred_check
          %p213 = pneg %p150
        $region30: #{tpu_custom_call.1} parent=11 // pred_check_branch
          %215 = sbr.rel (%p213) target = $region32
        $region31: #{tpu_custom_call.1} parent=11 // pred_region
          _
        $region32: #{tpu_custom_call.1} parent=11 // pred_fallthru
          _
      $region12: #{tpu_custom_call.1} parent=5 // pred_fallthru
        _
      %p216 = scmp.lt.s32.totalorder %s19, 2
      // Predicated region
      $region33: #{tpu_custom_call.1} parent=5 // pred_check
        %p217 = pneg %p216
      $region34: #{tpu_custom_call.1} parent=5 // pred_check_branch
        %219 = sbr.rel (%p217) target = $region36
      $region35: #{tpu_custom_call.1} parent=5 // pred_region
        // Predicated region
        $region37: #{tpu_custom_call.1} parent=35 // pred_check
          %p220 = pneg %p39
        $region38: #{tpu_custom_call.1} parent=35 // pred_check_branch
          %222 = sbr.rel (%p220) target = $region40
        $region39: #{tpu_custom_call.1} parent=35 // pred_region
          %s223 = sand.u32 %s29, 1
          %s224 = scalar_lea.sflag [#allocation3], %s223
          %s225 = sand.u32 %s29, 1
          %s226 = smul.addr %s225, 16
          %s227 = scalar_lea.vmem [#allocation2], %s226
          %s228 = smul.u32 2, %s19
          %s230 = ssub.s32 256, 256
          %231 = vsyncadd %s224, %s230
          %s232 = smul.addr %s228, 2
          %s233 = smul.addr %s232, 64
          %s234 = scalar_lea.hbm %s0, %s233
          %s235 = sshll.u32 %s227, 4
          %s236 = int_to_ptr.vmem [resolvable:$true] %s235
          %241 = dma.hbm_to_vmem [thread:$0]  %s234, 256, %s236, %s224, 128, 128, 8
        $region40: #{tpu_custom_call.1} parent=35 // pred_fallthru
          _
      $region36: #{tpu_custom_call.1} parent=5 // pred_fallthru
        _
      %p242 = scmp.le.s32.totalorder 1, %s19
      %p243 = scmp.lt.s32.totalorder %s19, 3
      %p244 = pnand %p242, %p243
      %p245 = pneg %p244
      // Predicated region
      $region41: #{tpu_custom_call.1} parent=5 // pred_check
        _
      $region42: #{tpu_custom_call.1} parent=5 // pred_check_branch
        %247 = sbr.rel (%p244) target = $region44
      $region43: #{tpu_custom_call.1} parent=5 // pred_region
        %s248 = ssub.s32 %s19, 1
        %s249 = sand.u32 %s32, 1
        %s250 = scalar_lea.sflag [#allocation3], %s249
        %s251 = sand.u32 %s32, 1
        %s252 = smul.addr %s251, 16
        %s253 = scalar_lea.vmem [#allocation2], %s252
        // Predicated region
        $region45: #{tpu_custom_call.1} parent=43 // pred_check
          %p254 = pneg %p45
        $region46: #{tpu_custom_call.1} parent=43 // pred_check_branch
          %256 = sbr.rel (%p254) target = $region48
        $region47: #{tpu_custom_call.1} parent=43 // pred_region
          %257 = dma.done %s250, 256
        $region48: #{tpu_custom_call.1} parent=43 // pred_fallthru
          _
        // Predicated region
        $region49: #{tpu_custom_call.1} parent=43 // pred_check
          %p258 = pneg %p87
        $region50: #{tpu_custom_call.1} parent=43 // pred_check_branch
          %260 = sbr.rel (%p258) target = $region52
        $region51: #{tpu_custom_call.1} parent=43 // pred_region
          %261 = dma.done [#allocation6], 13824
        $region52: #{tpu_custom_call.1} parent=43 // pred_fallthru
          _
        %s262 = sand.u32 %s32, 1
        %s263 = scalar_lea.sflag [#allocation3], %s262
        %s264 = sand.u32 %s32, 1
        %s265 = smul.addr %s264, 16
        %s266 = scalar_lea.vmem [#allocation2], %s265
        %p267 = pneg %p45
        %p268 = pneg %p42
        %p269 = pneg %p66
        %p270 = pneg %p63
        %p271 = pneg %p87
        %p272 = pneg %p84
        %p273 = pneg %p108
        %p274 = pneg %p105
        %p275 = pneg %p129
        %p276 = pneg %p126
        %p277 = pneg %p150
        %p278 = pneg %p147
        %p279 = pneg %p176
        %p280 = pneg %p173
        %s281 = sand.u32 %s163, 1
        %s282 = scalar_lea.sflag [#allocation4], %s281
        %s283 = sand.u32 %s163, 1
        %s284 = smul.addr %s283, 16
        %s285 = scalar_lea.vmem [#allocation7], %s284
        %s286 = smul.u32 2, %s24
        %s287 = smul.u32 2, %s24
        %v289 = vld [vmem:[%s3] sm:$0xff]
        %v290 = vld [vmem:[%s3 + $0x8] sm:$0xff]
        %v291 = vld [vmem:[%s1] sm:$0xf]
        %v292 = vld [vmem:[%s1 + $0x4] sm:$0xf]
        %v293 = vld [vmem:[%s4] sm:$0x3]
        %v294 = vld [vmem:[%s5] sm:$0xf]
        %v295 = vld [vmem:[%s253] sm:$0xff]
        %v297 = vcombine.high %v295, %v295
        %v299 = vpack.c.bf16 %v295, %v295
        %v300 = vpack.c.bf16 %v297, %v297
        %302 = vset.pattern.permute.xlu0 0
        %303 = vperm.xlu0 %302, %v289
        %v304 = vpop.permute.xlu0 %303
        %307 = vset.pattern.permute.xlu0 0
        %308 = vperm.xlu0 %307, %v290
        %v309 = vpop.permute.xlu0 %308
        %v313 = vunpack.c.l.b16 %v291
        %v314 = vunpack.c.l.b16 %v292
        %v315 = vpack.c.b16 %v314, %v313
        %vm316 = vcmask 31744
        %v318 = vsel %vm316, %v315, 0
        %vm320 = vcmask 1041408
        %v322 = vsel %vm320, %v299, 0
        %v325 = vsel %vm320, %v300, 0
        %327 = vmatprep.subr.bf16.mxu0 %v325
        %328 = vmatpush1.bf16.msra.mxu0 %v322
        %329 = vmatprep.subr.bf16.mxu0 0
        %330 = vmatpush1.bf16.msra.mxu0 0
        %331 = vmatprep.subr.bf16.mxu0 0
        %332 = vmatpush1.bf16.msra.mxu0 0
        %333 = vmatprep.subr.bf16.mxu0 0
        %334 = vmatpush1.bf16.msra.mxu0 0
        %335 = vmatprep.subr.bf16.mxu0 0
        %336 = vmatpush1.bf16.msra.mxu0 0
        %337 = vmatprep.subr.bf16.mxu0 0
        %338 = vmatpush1.bf16.msra.mxu0 0
        %339 = vmatprep.subr.bf16.mxu0 0
        %340 = vmatpush1.bf16.msra.mxu0 0
        %341 = vmatprep.subr.bf16.mxu0 0
        %342 = vmatpush1.bf16.msra.mxu0 0
        %343 = vmatprep.subr.bf16.mxu0 0
        %344 = vmatpush1.bf16.msra.mxu0 0
        %345 = vmatprep.subr.bf16.mxu0 0
        %346 = vmatpush1.bf16.msra.mxu0 0
        %347 = vmatprep.subr.bf16.mxu0 0
        %348 = vmatpush1.bf16.msra.mxu0 0
        %349 = vmatprep.subr.bf16.mxu0 0
        %350 = vmatpush1.bf16.msra.mxu0 0
        %351 = vmatprep.subr.bf16.mxu0 0
        %352 = vmatpush1.bf16.msra.mxu0 0
        %353 = vmatprep.subr.bf16.mxu0 0
        %354 = vmatpush1.bf16.msra.mxu0 0
        %355 = vmatprep.subr.bf16.mxu0 0
        %356 = vmatpush1.bf16.msra.mxu0 0
        %357 = vmatprep.subr.bf16.mxu0 0
        %358 = vmatpush1.bf16.msra.mxu0 0
        %359 = vmatprep.mubr.bf16.mxu0 0
        %360 = vmatmul.mubr.bf16.gmra.mrb[0].mxu0 %v318
        %v361 = vpop.f32.mrb[0].mxu0
        %v362 = vadd.f32 %v304, %v361
        %v363 = vpop.f32.mrb[0].mxu0
        %v364 = vadd.f32 %v304, %v363
        %v365 = vpop.f32.mrb[0].mxu0
        %v366 = vadd.f32 %v309, %v365
        %v367 = vpop.f32.mrb[0].mxu0
        %v368 = vadd.f32 %v309, %v367
        %369 = vdwg.mxu0
        %370 = vrot.lane.b32.xlu0 %v362, 17
        %v371 = vpop.permute.xlu0 %370
        %372 = vrot.lane.b32.xlu0 %v366, 17
        %v373 = vpop.permute.xlu0 %372
        %374 = vrot.lane.b32.xlu0 %v364, 17
        %v375 = vpop.permute.xlu0 %374
        %376 = vrot.lane.b32.xlu0 %v368, 17
        %v377 = vpop.permute.xlu0 %376
        %v378 = vlaneseq
        %v379 = vand.u32 %v378, 127
        %vm380 = vcmp.lt.s32.totalorder %v379, 17
        %v381 = vsel %vm380, %v371, %v375
        %v382 = vsel %vm380, %v373, %v377
        %v383 = vsel %vm380, %v375, %v371
        %v384 = vsel %vm380, %v377, %v373
        %v385 = vld [vmem:[#allocation5] sm:$0xff]
        %v386 = vld [vmem:[#allocation5 + $0x8] sm:$0xff]
        %v387 = vld [vmem:[#allocation5 + $0x10] sm:$0xff]
        %v388 = vld [vmem:[#allocation5 + $0x18] sm:$0xff]
        %v389 = vmul.f32 %v383, %v385
        %v390 = vmul.f32 %v381, %v386
        %v391 = vmul.f32 %v384, %v387
        %v392 = vmul.f32 %v382, %v388
        %393 = vrot.lane.b32.xlu0 %v362, 16
        %v394 = vpop.permute.xlu0 %393
        %395 = vrot.lane.b32.xlu0 %v366, 16
        %v396 = vpop.permute.xlu0 %395
        %397 = vrot.lane.b32.xlu0 %v364, 16
        %v398 = vpop.permute.xlu0 %397
        %399 = vrot.lane.b32.xlu0 %v368, 16
        %v400 = vpop.permute.xlu0 %399
        %vm401 = vcmp.lt.s32.totalorder %v379, 16
        %v402 = vsel %vm401, %v394, %v398
        %v403 = vsel %vm401, %v396, %v400
        %v404 = vsel %vm401, %v398, %v394
        %v405 = vsel %vm401, %v400, %v396
        %s406 = scalar_lea.vmem [#allocation5], 32
        %v407 = vld [vmem:[%s406] sm:$0xff]
        %v408 = vld [vmem:[%s406 + $0x8] sm:$0xff]
        %v409 = vld [vmem:[%s406 + $0x10] sm:$0xff]
        %v410 = vld [vmem:[%s406 + $0x18] sm:$0xff]
        %v411 = vmul.f32 %v404, %v407
        %v412 = vmul.f32 %v402, %v408
        %v413 = vmul.f32 %v405, %v409
        %v414 = vmul.f32 %v403, %v410
        %v415 = vadd.f32 %v389, %v411
        %v416 = vadd.f32 %v390, %v412
        %v417 = vadd.f32 %v391, %v413
        %v418 = vadd.f32 %v392, %v414
        %419 = vrot.lane.b32.xlu0 %v362, 15
        %v420 = vpop.permute.xlu0 %419
        %421 = vrot.lane.b32.xlu0 %v366, 15
        %v422 = vpop.permute.xlu0 %421
        %423 = vrot.lane.b32.xlu0 %v364, 15
        %v424 = vpop.permute.xlu0 %423
        %425 = vrot.lane.b32.xlu0 %v368, 15
        %v426 = vpop.permute.xlu0 %425
        %vm427 = vcmp.lt.s32.totalorder %v379, 15
        %v428 = vsel %vm427, %v420, %v424
        %v429 = vsel %vm427, %v422, %v426
        %v430 = vsel %vm427, %v424, %v420
        %v431 = vsel %vm427, %v426, %v422
        %s432 = scalar_lea.vmem [#allocation5], 64
        %v433 = vld [vmem:[%s432] sm:$0xff]
        %v434 = vld [vmem:[%s432 + $0x8] sm:$0xff]
        %v435 = vld [vmem:[%s432 + $0x10] sm:$0xff]
        %v436 = vld [vmem:[%s432 + $0x18] sm:$0xff]
        %v437 = vmul.f32 %v430, %v433
        %v438 = vmul.f32 %v428, %v434
        %v439 = vmul.f32 %v431, %v435
        %v440 = vmul.f32 %v429, %v436
        %v441 = vadd.f32 %v415, %v437
        %v442 = vadd.f32 %v416, %v438
        %v443 = vadd.f32 %v417, %v439
        %v444 = vadd.f32 %v418, %v440
        %445 = vrot.lane.b32.xlu0 %v362, 1
        %v446 = vpop.permute.xlu0 %445
        %447 = vrot.lane.b32.xlu0 %v366, 1
        %v448 = vpop.permute.xlu0 %447
        %449 = vrot.lane.b32.xlu0 %v364, 1
        %v450 = vpop.permute.xlu0 %449
        %451 = vrot.lane.b32.xlu0 %v368, 1
        %v452 = vpop.permute.xlu0 %451
        %vm453 = vcmp.lt.s32.totalorder %v379, 1
        %v454 = vsel %vm453, %v446, %v450
        %v455 = vsel %vm453, %v448, %v452
        %v456 = vsel %vm453, %v450, %v446
        %v457 = vsel %vm453, %v452, %v448
        %s458 = scalar_lea.vmem [#allocation5], 96
        %v459 = vld [vmem:[%s458] sm:$0xff]
        %v460 = vld [vmem:[%s458 + $0x8] sm:$0xff]
        %v461 = vld [vmem:[%s458 + $0x10] sm:$0xff]
        %v462 = vld [vmem:[%s458 + $0x18] sm:$0xff]
        %v463 = vmul.f32 %v456, %v459
        %v464 = vmul.f32 %v454, %v460
        %v465 = vmul.f32 %v457, %v461
        %v466 = vmul.f32 %v455, %v462
        %s467 = scalar_lea.vmem [#allocation5], 128
        %v468 = vld [vmem:[%s467] sm:$0xff]
        %v469 = vld [vmem:[%s467 + $0x8] sm:$0xff]
        %v470 = vld [vmem:[%s467 + $0x10] sm:$0xff]
        %v471 = vld [vmem:[%s467 + $0x18] sm:$0xff]
        %v472 = vmul.f32 %v362, %v468
        %v473 = vmul.f32 %v364, %v469
        %v474 = vmul.f32 %v366, %v470
        %v475 = vmul.f32 %v368, %v471
        %v476 = vadd.f32 %v463, %v472
        %v477 = vadd.f32 %v464, %v473
        %v478 = vadd.f32 %v465, %v474
        %v479 = vadd.f32 %v466, %v475
        %480 = vrot.lane.b32.xlu0 %v362, 127
        %v481 = vpop.permute.xlu0 %480
        %482 = vrot.lane.b32.xlu0 %v366, 127
        %v483 = vpop.permute.xlu0 %482
        %484 = vrot.lane.b32.xlu0 %v364, 127
        %v485 = vpop.permute.xlu0 %484
        %486 = vrot.lane.b32.xlu0 %v368, 127
        %v487 = vpop.permute.xlu0 %486
        %vm488 = vcmp.lt.s32.totalorder %v379, 127
        %v489 = vsel %vm488, %v481, %v485
        %v490 = vsel %vm488, %v483, %v487
        %v491 = vsel %vm488, %v485, %v481
        %v492 = vsel %vm488, %v487, %v483
        %s493 = scalar_lea.vmem [#allocation5], 160
        %v494 = vld [vmem:[%s493] sm:$0xff]
        %v495 = vld [vmem:[%s493 + $0x8] sm:$0xff]
        %v496 = vld [vmem:[%s493 + $0x10] sm:$0xff]
        %v497 = vld [vmem:[%s493 + $0x18] sm:$0xff]
        %v498 = vmul.f32 %v489, %v494
        %v499 = vmul.f32 %v491, %v495
        %v500 = vmul.f32 %v490, %v496
        %v501 = vmul.f32 %v492, %v497
        %v502 = vadd.f32 %v476, %v498
        %v503 = vadd.f32 %v477, %v499
        %v504 = vadd.f32 %v478, %v500
        %v505 = vadd.f32 %v479, %v501
        %506 = vrot.lane.b32.xlu0 %v362, 113
        %v507 = vpop.permute.xlu0 %506
        %508 = vrot.lane.b32.xlu0 %v366, 113
        %v509 = vpop.permute.xlu0 %508
        %510 = vrot.lane.b32.xlu0 %v364, 113
        %v511 = vpop.permute.xlu0 %510
        %512 = vrot.lane.b32.xlu0 %v368, 113
        %v513 = vpop.permute.xlu0 %512
        %vm514 = vcmp.lt.s32.totalorder %v379, 113
        %v515 = vsel %vm514, %v507, %v511
        %v516 = vsel %vm514, %v509, %v513
        %v517 = vsel %vm514, %v511, %v507
        %v518 = vsel %vm514, %v513, %v509
        %s519 = scalar_lea.vmem [#allocation5], 192
        %v520 = vld [vmem:[%s519] sm:$0xff]
        %v521 = vld [vmem:[%s519 + $0x8] sm:$0xff]
        %v522 = vld [vmem:[%s519 + $0x10] sm:$0xff]
        %v523 = vld [vmem:[%s519 + $0x18] sm:$0xff]
        %v524 = vmul.f32 %v515, %v520
        %v525 = vmul.f32 %v517, %v521
        %v526 = vmul.f32 %v516, %v522
        %v527 = vmul.f32 %v518, %v523
        %528 = vrot.lane.b32.xlu0 %v362, 112
        %v529 = vpop.permute.xlu0 %528
        %530 = vrot.lane.b32.xlu0 %v366, 112
        %v531 = vpop.permute.xlu0 %530
        %532 = vrot.lane.b32.xlu0 %v364, 112
        %v533 = vpop.permute.xlu0 %532
        %534 = vrot.lane.b32.xlu0 %v368, 112
        %v535 = vpop.permute.xlu0 %534
        %vm536 = vcmp.lt.s32.totalorder %v379, 112
        %v537 = vsel %vm536, %v529, %v533
        %v538 = vsel %vm536, %v531, %v535
        %v539 = vsel %vm536, %v533, %v529
        %v540 = vsel %vm536, %v535, %v531
        %s541 = scalar_lea.vmem [#allocation5], 224
        %v542 = vld [vmem:[%s541] sm:$0xff]
        %v543 = vld [vmem:[%s541 + $0x8] sm:$0xff]
        %v544 = vld [vmem:[%s541 + $0x10] sm:$0xff]
        %v545 = vld [vmem:[%s541 + $0x18] sm:$0xff]
        %v546 = vmul.f32 %v537, %v542
        %v547 = vmul.f32 %v539, %v543
        %v548 = vmul.f32 %v538, %v544
        %v549 = vmul.f32 %v540, %v545
        %v550 = vadd.f32 %v524, %v546
        %v551 = vadd.f32 %v525, %v547
        %v552 = vadd.f32 %v526, %v548
        %v553 = vadd.f32 %v527, %v549
        %554 = vrot.lane.b32.xlu0 %v362, 111
        %v555 = vpop.permute.xlu0 %554
        %556 = vrot.lane.b32.xlu0 %v366, 111
        %v557 = vpop.permute.xlu0 %556
        %558 = vrot.lane.b32.xlu0 %v364, 111
        %v559 = vpop.permute.xlu0 %558
        %560 = vrot.lane.b32.xlu0 %v368, 111
        %v561 = vpop.permute.xlu0 %560
        %vm562 = vcmp.lt.s32.totalorder %v379, 111
        %v563 = vsel %vm562, %v555, %v559
        %v564 = vsel %vm562, %v557, %v561
        %v565 = vsel %vm562, %v559, %v555
        %v566 = vsel %vm562, %v561, %v557
        %s567 = scalar_lea.vmem [#allocation5], 256
        %v568 = vld [vmem:[%s567] sm:$0xff]
        %v569 = vld [vmem:[%s567 + $0x8] sm:$0xff]
        %v570 = vld [vmem:[%s567 + $0x10] sm:$0xff]
        %v571 = vld [vmem:[%s567 + $0x18] sm:$0xff]
        %v572 = vmul.f32 %v563, %v568
        %v573 = vmul.f32 %v565, %v569
        %v574 = vmul.f32 %v564, %v570
        %v575 = vmul.f32 %v566, %v571
        %v576 = vadd.f32 %v550, %v572
        %v577 = vadd.f32 %v551, %v573
        %v578 = vadd.f32 %v552, %v574
        %v579 = vadd.f32 %v553, %v575
        %v580 = vadd.f32 %v441, %v576
        %v581 = vadd.f32 %v442, %v577
        %v582 = vadd.f32 %v443, %v578
        %v583 = vadd.f32 %v444, %v579
        %v584 = vadd.f32 %v580, %v502
        %v585 = vadd.f32 %v581, %v503
        %v586 = vadd.f32 %v582, %v504
        %v587 = vadd.f32 %v583, %v505
        %588 = vset.pattern.permute.xlu0 1
        %589 = vperm.xlu0 %588, %v289
        %v590 = vpop.permute.xlu0 %589
        %592 = vset.pattern.permute.xlu0 1
        %593 = vperm.xlu0 %592, %v290
        %v594 = vpop.permute.xlu0 %593
        %v596 = vadd.f32 %v584, %v590
        %v597 = vadd.f32 %v585, %v590
        %v598 = vadd.f32 %v586, %v594
        %v599 = vadd.f32 %v587, %v594
        %v600 = vmax.f32 %v362, %v596
        %v601 = vmax.f32 %v364, %v597
        %v602 = vmax.f32 %v366, %v598
        %v603 = vmax.f32 %v368, %v599
        %604 = vrot.lane.b32.xlu0 %v600, 17
        %v605 = vpop.permute.xlu0 %604
        %606 = vrot.lane.b32.xlu0 %v602, 17
        %v607 = vpop.permute.xlu0 %606
        %608 = vrot.lane.b32.xlu0 %v601, 17
        %v609 = vpop.permute.xlu0 %608
        %610 = vrot.lane.b32.xlu0 %v603, 17
        %v611 = vpop.permute.xlu0 %610
        %v612 = vsel %vm380, %v605, %v609
        %v613 = vsel %vm380, %v607, %v611
        %v614 = vsel %vm380, %v609, %v605
        %v615 = vsel %vm380, %v611, %v607
        %s616 = scalar_lea.vmem [#allocation5], 288
        %v617 = vld [vmem:[%s616] sm:$0xff]
        %v618 = vld [vmem:[%s616 + $0x8] sm:$0xff]
        %v619 = vld [vmem:[%s616 + $0x10] sm:$0xff]
        %v620 = vld [vmem:[%s616 + $0x18] sm:$0xff]
        %v621 = vmul.f32 %v614, %v617
        %v622 = vmul.f32 %v612, %v618
        %v623 = vmul.f32 %v615, %v619
        %v624 = vmul.f32 %v613, %v620
        %625 = vrot.lane.b32.xlu0 %v600, 16
        %v626 = vpop.permute.xlu0 %625
        %627 = vrot.lane.b32.xlu0 %v602, 16
        %v628 = vpop.permute.xlu0 %627
        %629 = vrot.lane.b32.xlu0 %v601, 16
        %v630 = vpop.permute.xlu0 %629
        %631 = vrot.lane.b32.xlu0 %v603, 16
        %v632 = vpop.permute.xlu0 %631
        %v633 = vsel %vm401, %v626, %v630
        %v634 = vsel %vm401, %v628, %v632
        %v635 = vsel %vm401, %v630, %v626
        %v636 = vsel %vm401, %v632, %v628
        %s637 = scalar_lea.vmem [#allocation5], 320
        %v638 = vld [vmem:[%s637] sm:$0xff]
        %v639 = vld [vmem:[%s637 + $0x8] sm:$0xff]
        %v640 = vld [vmem:[%s637 + $0x10] sm:$0xff]
        %v641 = vld [vmem:[%s637 + $0x18] sm:$0xff]
        %v642 = vmul.f32 %v635, %v638
        %v643 = vmul.f32 %v633, %v639
        %v644 = vmul.f32 %v636, %v640
        %v645 = vmul.f32 %v634, %v641
        %v646 = vadd.f32 %v621, %v642
        %v647 = vadd.f32 %v622, %v643
        %v648 = vadd.f32 %v623, %v644
        %v649 = vadd.f32 %v624, %v645
        %650 = vrot.lane.b32.xlu0 %v600, 15
        %v651 = vpop.permute.xlu0 %650
        %652 = vrot.lane.b32.xlu0 %v602, 15
        %v653 = vpop.permute.xlu0 %652
        %654 = vrot.lane.b32.xlu0 %v601, 15
        %v655 = vpop.permute.xlu0 %654
        %656 = vrot.lane.b32.xlu0 %v603, 15
        %v657 = vpop.permute.xlu0 %656
        %v658 = vsel %vm427, %v651, %v655
        %v659 = vsel %vm427, %v653, %v657
        %v660 = vsel %vm427, %v655, %v651
        %v661 = vsel %vm427, %v657, %v653
        %s662 = scalar_lea.vmem [#allocation5], 352
        %v663 = vld [vmem:[%s662] sm:$0xff]
        %v664 = vld [vmem:[%s662 + $0x8] sm:$0xff]
        %v665 = vld [vmem:[%s662 + $0x10] sm:$0xff]
        %v666 = vld [vmem:[%s662 + $0x18] sm:$0xff]
        %v667 = vmul.f32 %v660, %v663
        %v668 = vmul.f32 %v658, %v664
        %v669 = vmul.f32 %v661, %v665
        %v670 = vmul.f32 %v659, %v666
        %v671 = vadd.f32 %v646, %v667
        %v672 = vadd.f32 %v647, %v668
        %v673 = vadd.f32 %v648, %v669
        %v674 = vadd.f32 %v649, %v670
        %675 = vrot.lane.b32.xlu0 %v600, 1
        %v676 = vpop.permute.xlu0 %675
        %677 = vrot.lane.b32.xlu0 %v602, 1
        %v678 = vpop.permute.xlu0 %677
        %679 = vrot.lane.b32.xlu0 %v601, 1
        %v680 = vpop.permute.xlu0 %679
        %681 = vrot.lane.b32.xlu0 %v603, 1
        %v682 = vpop.permute.xlu0 %681
        %v683 = vsel %vm453, %v676, %v680
        %v684 = vsel %vm453, %v678, %v682
        %v685 = vsel %vm453, %v680, %v676
        %v686 = vsel %vm453, %v682, %v678
        %s687 = scalar_lea.vmem [#allocation5], 384
        %v688 = vld [vmem:[%s687] sm:$0xff]
        %v689 = vld [vmem:[%s687 + $0x8] sm:$0xff]
        %v690 = vld [vmem:[%s687 + $0x10] sm:$0xff]
        %v691 = vld [vmem:[%s687 + $0x18] sm:$0xff]
        %v692 = vmul.f32 %v685, %v688
        %v693 = vmul.f32 %v683, %v689
        %v694 = vmul.f32 %v686, %v690
        %v695 = vmul.f32 %v684, %v691
        %s696 = scalar_lea.vmem [#allocation5], 416
        %v697 = vld [vmem:[%s696] sm:$0xff]
        %v698 = vld [vmem:[%s696 + $0x8] sm:$0xff]
        %v699 = vld [vmem:[%s696 + $0x10] sm:$0xff]
        %v700 = vld [vmem:[%s696 + $0x18] sm:$0xff]
        %v701 = vmul.f32 %v600, %v697
        %v702 = vmul.f32 %v601, %v698
        %v703 = vmul.f32 %v602, %v699
        %v704 = vmul.f32 %v603, %v700
        %v705 = vadd.f32 %v692, %v701
        %v706 = vadd.f32 %v693, %v702
        %v707 = vadd.f32 %v694, %v703
        %v708 = vadd.f32 %v695, %v704
        %709 = vrot.lane.b32.xlu0 %v600, 127
        %v710 = vpop.permute.xlu0 %709
        %711 = vrot.lane.b32.xlu0 %v602, 127
        %v712 = vpop.permute.xlu0 %711
        %713 = vrot.lane.b32.xlu0 %v601, 127
        %v714 = vpop.permute.xlu0 %713
        %715 = vrot.lane.b32.xlu0 %v603, 127
        %v716 = vpop.permute.xlu0 %715
        %v717 = vsel %vm488, %v710, %v714
        %v718 = vsel %vm488, %v712, %v716
        %v719 = vsel %vm488, %v714, %v710
        %v720 = vsel %vm488, %v716, %v712
        %s721 = scalar_lea.vmem [#allocation5], 448
        %v722 = vld [vmem:[%s721] sm:$0xff]
        %v723 = vld [vmem:[%s721 + $0x8] sm:$0xff]
        %v724 = vld [vmem:[%s721 + $0x10] sm:$0xff]
        %v725 = vld [vmem:[%s721 + $0x18] sm:$0xff]
        %v726 = vmul.f32 %v717, %v722
        %v727 = vmul.f32 %v719, %v723
        %v728 = vmul.f32 %v718, %v724
        %v729 = vmul.f32 %v720, %v725
        %v730 = vadd.f32 %v705, %v726
        %v731 = vadd.f32 %v706, %v727
        %v732 = vadd.f32 %v707, %v728
        %v733 = vadd.f32 %v708, %v729
        %734 = vrot.lane.b32.xlu0 %v600, 113
        %v735 = vpop.permute.xlu0 %734
        %736 = vrot.lane.b32.xlu0 %v602, 113
        %v737 = vpop.permute.xlu0 %736
        %738 = vrot.lane.b32.xlu0 %v601, 113
        %v739 = vpop.permute.xlu0 %738
        %740 = vrot.lane.b32.xlu0 %v603, 113
        %v741 = vpop.permute.xlu0 %740
        %v742 = vsel %vm514, %v735, %v739
        %v743 = vsel %vm514, %v737, %v741
        %v744 = vsel %vm514, %v739, %v735
        %v745 = vsel %vm514, %v741, %v737
        %s746 = scalar_lea.vmem [#allocation5], 480
        %v747 = vld [vmem:[%s746] sm:$0xff]
        %v748 = vld [vmem:[%s746 + $0x8] sm:$0xff]
        %v749 = vld [vmem:[%s746 + $0x10] sm:$0xff]
        %v750 = vld [vmem:[%s746 + $0x18] sm:$0xff]
        %v751 = vmul.f32 %v742, %v747
        %v752 = vmul.f32 %v744, %v748
        %v753 = vmul.f32 %v743, %v749
        %v754 = vmul.f32 %v745, %v750
        %755 = vrot.lane.b32.xlu0 %v600, 112
        %v756 = vpop.permute.xlu0 %755
        %757 = vrot.lane.b32.xlu0 %v602, 112
        %v758 = vpop.permute.xlu0 %757
        %759 = vrot.lane.b32.xlu0 %v601, 112
        %v760 = vpop.permute.xlu0 %759
        %761 = vrot.lane.b32.xlu0 %v603, 112
        %v762 = vpop.permute.xlu0 %761
        %v763 = vsel %vm536, %v756, %v760
        %v764 = vsel %vm536, %v758, %v762
        %v765 = vsel %vm536, %v760, %v756
        %v766 = vsel %vm536, %v762, %v758
        %s767 = scalar_lea.vmem [#allocation5], 512
        %v768 = vld [vmem:[%s767] sm:$0xff]
        %v769 = vld [vmem:[%s767 + $0x8] sm:$0xff]
        %v770 = vld [vmem:[%s767 + $0x10] sm:$0xff]
        %v771 = vld [vmem:[%s767 + $0x18] sm:$0xff]
        %v772 = vmul.f32 %v763, %v768
        %v773 = vmul.f32 %v765, %v769
        %v774 = vmul.f32 %v764, %v770
        %v775 = vmul.f32 %v766, %v771
        %v776 = vadd.f32 %v751, %v772
        %v777 = vadd.f32 %v752, %v773
        %v778 = vadd.f32 %v753, %v774
        %v779 = vadd.f32 %v754, %v775
        %780 = vrot.lane.b32.xlu0 %v600, 111
        %v781 = vpop.permute.xlu0 %780
        %782 = vrot.lane.b32.xlu0 %v602, 111
        %v783 = vpop.permute.xlu0 %782
        %784 = vrot.lane.b32.xlu0 %v601, 111
        %v785 = vpop.permute.xlu0 %784
        %786 = vrot.lane.b32.xlu0 %v603, 111
        %v787 = vpop.permute.xlu0 %786
        %v788 = vsel %vm562, %v781, %v785
        %v789 = vsel %vm562, %v783, %v787
        %v790 = vsel %vm562, %v785, %v781
        %v791 = vsel %vm562, %v787, %v783
        %s792 = scalar_lea.vmem [#allocation5], 544
        %v793 = vld [vmem:[%s792] sm:$0xff]
        %v794 = vld [vmem:[%s792 + $0x8] sm:$0xff]
        %v795 = vld [vmem:[%s792 + $0x10] sm:$0xff]
        %v796 = vld [vmem:[%s792 + $0x18] sm:$0xff]
        %v797 = vmul.f32 %v788, %v793
        %v798 = vmul.f32 %v790, %v794
        %v799 = vmul.f32 %v789, %v795
        %v800 = vmul.f32 %v791, %v796
        %v801 = vadd.f32 %v776, %v797
        %v802 = vadd.f32 %v777, %v798
        %v803 = vadd.f32 %v778, %v799
        %v804 = vadd.f32 %v779, %v800
        %v805 = vadd.f32 %v671, %v801
        %v806 = vadd.f32 %v672, %v802
        %v807 = vadd.f32 %v673, %v803
        %v808 = vadd.f32 %v674, %v804
        %v809 = vadd.f32 %v805, %v730
        %v810 = vadd.f32 %v806, %v731
        %v811 = vadd.f32 %v807, %v732
        %v812 = vadd.f32 %v808, %v733
        %v813 = vadd.f32 %v809, %v810
        %814 = vadd.xlane.f32.xlu0 %v813
        %v815 = vpop.xlane.xlu0 %814
        %v816 = vadd.f32 %v811, %v812
        %817 = vadd.xlane.f32.xlu0 %v816
        %v818 = vpop.xlane.xlu0 %817
        %v819 = vrcp.pop 256.0
        %v820 = vmul.f32 %v815, %v819
        %v821 = vmul.f32 %v818, %v819
        %v822 = vmul.f32 %v820, %v289
        %v823 = vmul.f32 %v821, %v290
        %vm824 = vcmask 72744
        %v825 = vsel %vm824, %v822, 0.0
        %v826 = vsel %vm824, %v823, 0.0
        %v827 = vadd.f32 %v825, %v826
        %v828 = vrot.slane %v827, 4
        %v829 = vadd.f32 %v827, %v828
        %v830 = vrot.slane %v829, 2
        %v831 = vadd.f32 %v829, %v830
        %v832 = vrot.slane %v831, 1
        %v833 = vadd.f32 %v831, %v832
        %v834 = vmax.f32 %v833, 0.0
        %836 = vrot.lane.b32.xlu0 %v834, 4
        %v837 = vpop.permute.xlu0 %836
        %v839 = vmul.f32 %v289, %v837
        %v840 = vmul.f32 %v290, %v837
        %843 = vrot.lane.b32.xlu0 %v839, 119
        %v844 = vpop.permute.xlu0 %843
        %845 = vrot.lane.b32.xlu0 %v840, 119
        %v846 = vpop.permute.xlu0 %845
        %v849 = vsel %vm316, %v844, 0.0
        %850 = vadd.xlane.f32.xlu0 %v849
        %v851 = vpop.xlane.xlu0 %850
        %v852 = vsel %vm316, %v846, 0.0
        %853 = vadd.xlane.f32.xlu0 %v852
        %v854 = vpop.xlane.xlu0 %853
        %v855 = vxor.u32 %v851, 2147483648
        %v856 = vxor.u32 %v854, 2147483648
        %v857 = vmul.f32 %v855, 1.442695
        %v858 = vpow.pop %v857
        %v859 = vmul.f32 %v856, 1.442695
        %v860 = vpow.pop %v859
        %v861 = vadd.f32 %v858, 1.0
        %v862 = vadd.f32 %v860, 1.0
        %v863 = vrcp.pop %v861
        %v864 = vmul.f32 1.0, %v863
        %v865 = vrcp.pop %v862
        %v866 = vmul.f32 1.0, %v865
        %v867 = vmul.f32 %v809, %v864
        %v868 = vmul.f32 %v810, %v864
        %v869 = vmul.f32 %v811, %v866
        %v870 = vmul.f32 %v812, %v866
        %871 = vset.pattern.permute.xlu0 2
        %872 = vperm.xlu0 %871, %v289
        %v873 = vpop.permute.xlu0 %872
        %875 = vset.pattern.permute.xlu0 2
        %876 = vperm.xlu0 %875, %v290
        %v877 = vpop.permute.xlu0 %876
        %v879 = vmul.f32 %v867, %v873
        %v880 = vmul.f32 %v868, %v873
        %v881 = vmul.f32 %v869, %v877
        %v882 = vmul.f32 %v870, %v877
        %883 = vset.pattern.permute.xlu0 3
        %884 = vperm.xlu0 %883, %v289
        %v885 = vpop.permute.xlu0 %884
        %887 = vset.pattern.permute.xlu0 3
        %888 = vperm.xlu0 %887, %v290
        %v889 = vpop.permute.xlu0 %888
        %v891 = vadd.f32 %v879, %v885
        %v892 = vadd.f32 %v880, %v885
        %v893 = vadd.f32 %v881, %v889
        %v894 = vadd.f32 %v882, %v889
        %895 = vrot.lane.b32.xlu0 %v891, 17
        %v896 = vpop.permute.xlu0 %895
        %897 = vrot.lane.b32.xlu0 %v893, 17
        %v898 = vpop.permute.xlu0 %897
        %899 = vrot.lane.b32.xlu0 %v892, 17
        %v900 = vpop.permute.xlu0 %899
        %901 = vrot.lane.b32.xlu0 %v894, 17
        %v902 = vpop.permute.xlu0 %901
        %v903 = vsel %vm380, %v896, %v900
        %v904 = vsel %vm380, %v898, %v902
        %v905 = vsel %vm380, %v900, %v896
        %v906 = vsel %vm380, %v902, %v898
        %s907 = scalar_lea.vmem [#allocation5], 576
        %v908 = vld [vmem:[%s907] sm:$0xff]
        %v909 = vld [vmem:[%s907 + $0x8] sm:$0xff]
        %v910 = vld [vmem:[%s907 + $0x10] sm:$0xff]
        %v911 = vld [vmem:[%s907 + $0x18] sm:$0xff]
        %v912 = vmul.f32 %v905, %v908
        %v913 = vmul.f32 %v903, %v909
        %v914 = vmul.f32 %v906, %v910
        %v915 = vmul.f32 %v904, %v911
        %916 = vrot.lane.b32.xlu0 %v891, 16
        %v917 = vpop.permute.xlu0 %916
        %918 = vrot.lane.b32.xlu0 %v893, 16
        %v919 = vpop.permute.xlu0 %918
        %920 = vrot.lane.b32.xlu0 %v892, 16
        %v921 = vpop.permute.xlu0 %920
        %922 = vrot.lane.b32.xlu0 %v894, 16
        %v923 = vpop.permute.xlu0 %922
        %v924 = vsel %vm401, %v917, %v921
        %v925 = vsel %vm401, %v919, %v923
        %v926 = vsel %vm401, %v921, %v917
        %v927 = vsel %vm401, %v923, %v919
        %s928 = scalar_lea.vmem [#allocation5], 608
        %v929 = vld [vmem:[%s928] sm:$0xff]
        %v930 = vld [vmem:[%s928 + $0x8] sm:$0xff]
        %v931 = vld [vmem:[%s928 + $0x10] sm:$0xff]
        %v932 = vld [vmem:[%s928 + $0x18] sm:$0xff]
        %v933 = vmul.f32 %v926, %v929
        %v934 = vmul.f32 %v924, %v930
        %v935 = vmul.f32 %v927, %v931
        %v936 = vmul.f32 %v925, %v932
        %v937 = vadd.f32 %v912, %v933
        %v938 = vadd.f32 %v913, %v934
        %v939 = vadd.f32 %v914, %v935
        %v940 = vadd.f32 %v915, %v936
        %941 = vrot.lane.b32.xlu0 %v891, 15
        %v942 = vpop.permute.xlu0 %941
        %943 = vrot.lane.b32.xlu0 %v893, 15
        %v944 = vpop.permute.xlu0 %943
        %945 = vrot.lane.b32.xlu0 %v892, 15
        %v946 = vpop.permute.xlu0 %945
        %947 = vrot.lane.b32.xlu0 %v894, 15
        %v948 = vpop.permute.xlu0 %947
        %v949 = vsel %vm427, %v942, %v946
        %v950 = vsel %vm427, %v944, %v948
        %v951 = vsel %vm427, %v946, %v942
        %v952 = vsel %vm427, %v948, %v944
        %s953 = scalar_lea.vmem [#allocation5], 640
        %v954 = vld [vmem:[%s953] sm:$0xff]
        %v955 = vld [vmem:[%s953 + $0x8] sm:$0xff]
        %v956 = vld [vmem:[%s953 + $0x10] sm:$0xff]
        %v957 = vld [vmem:[%s953 + $0x18] sm:$0xff]
        %v958 = vmul.f32 %v951, %v954
        %v959 = vmul.f32 %v949, %v955
        %v960 = vmul.f32 %v952, %v956
        %v961 = vmul.f32 %v950, %v957
        %v962 = vadd.f32 %v937, %v958
        %v963 = vadd.f32 %v938, %v959
        %v964 = vadd.f32 %v939, %v960
        %v965 = vadd.f32 %v940, %v961
        %966 = vrot.lane.b32.xlu0 %v891, 1
        %v967 = vpop.permute.xlu0 %966
        %968 = vrot.lane.b32.xlu0 %v893, 1
        %v969 = vpop.permute.xlu0 %968
        %970 = vrot.lane.b32.xlu0 %v892, 1
        %v971 = vpop.permute.xlu0 %970
        %972 = vrot.lane.b32.xlu0 %v894, 1
        %v973 = vpop.permute.xlu0 %972
        %v974 = vsel %vm453, %v967, %v971
        %v975 = vsel %vm453, %v969, %v973
        %v976 = vsel %vm453, %v971, %v967
        %v977 = vsel %vm453, %v973, %v969
        %s978 = scalar_lea.vmem [#allocation5], 672
        %v979 = vld [vmem:[%s978] sm:$0xff]
        %v980 = vld [vmem:[%s978 + $0x8] sm:$0xff]
        %v981 = vld [vmem:[%s978 + $0x10] sm:$0xff]
        %v982 = vld [vmem:[%s978 + $0x18] sm:$0xff]
        %v983 = vmul.f32 %v976, %v979
        %v984 = vmul.f32 %v974, %v980
        %v985 = vmul.f32 %v977, %v981
        %v986 = vmul.f32 %v975, %v982
        %s987 = scalar_lea.vmem [#allocation5], 704
        %v988 = vld [vmem:[%s987] sm:$0xff]
        %v989 = vld [vmem:[%s987 + $0x8] sm:$0xff]
        %v990 = vld [vmem:[%s987 + $0x10] sm:$0xff]
        %v991 = vld [vmem:[%s987 + $0x18] sm:$0xff]
        %v992 = vmul.f32 %v891, %v988
        %v993 = vmul.f32 %v892, %v989
        %v994 = vmul.f32 %v893, %v990
        %v995 = vmul.f32 %v894, %v991
        %v996 = vadd.f32 %v983, %v992
        %v997 = vadd.f32 %v984, %v993
        %v998 = vadd.f32 %v985, %v994
        %v999 = vadd.f32 %v986, %v995
        %1000 = vrot.lane.b32.xlu0 %v891, 127
        %v1001 = vpop.permute.xlu0 %1000
        %1002 = vrot.lane.b32.xlu0 %v893, 127
        %v1003 = vpop.permute.xlu0 %1002
        %1004 = vrot.lane.b32.xlu0 %v892, 127
        %v1005 = vpop.permute.xlu0 %1004
        %1006 = vrot.lane.b32.xlu0 %v894, 127
        %v1007 = vpop.permute.xlu0 %1006
        %v1008 = vsel %vm488, %v1001, %v1005
        %v1009 = vsel %vm488, %v1003, %v1007
        %v1010 = vsel %vm488, %v1005, %v1001
        %v1011 = vsel %vm488, %v1007, %v1003
        %s1012 = scalar_lea.vmem [#allocation5], 736
        %v1013 = vld [vmem:[%s1012] sm:$0xff]
        %v1014 = vld [vmem:[%s1012 + $0x8] sm:$0xff]
        %v1015 = vld [vmem:[%s1012 + $0x10] sm:$0xff]
        %v1016 = vld [vmem:[%s1012 + $0x18] sm:$0xff]
        %v1017 = vmul.f32 %v1008, %v1013
        %v1018 = vmul.f32 %v1010, %v1014
        %v1019 = vmul.f32 %v1009, %v1015
        %v1020 = vmul.f32 %v1011, %v1016
        %v1021 = vadd.f32 %v996, %v1017
        %v1022 = vadd.f32 %v997, %v1018
        %v1023 = vadd.f32 %v998, %v1019
        %v1024 = vadd.f32 %v999, %v1020
        %1025 = vrot.lane.b32.xlu0 %v891, 113
        %v1026 = vpop.permute.xlu0 %1025
        %1027 = vrot.lane.b32.xlu0 %v893, 113
        %v1028 = vpop.permute.xlu0 %1027
        %1029 = vrot.lane.b32.xlu0 %v892, 113
        %v1030 = vpop.permute.xlu0 %1029
        %1031 = vrot.lane.b32.xlu0 %v894, 113
        %v1032 = vpop.permute.xlu0 %1031
        %v1033 = vsel %vm514, %v1026, %v1030
        %v1034 = vsel %vm514, %v1028, %v1032
        %v1035 = vsel %vm514, %v1030, %v1026
        %v1036 = vsel %vm514, %v1032, %v1028
        %s1037 = scalar_lea.vmem [#allocation5], 768
        %v1038 = vld [vmem:[%s1037] sm:$0xff]
        %v1039 = vld [vmem:[%s1037 + $0x8] sm:$0xff]
        %v1040 = vld [vmem:[%s1037 + $0x10] sm:$0xff]
        %v1041 = vld [vmem:[%s1037 + $0x18] sm:$0xff]
        %v1042 = vmul.f32 %v1033, %v1038
        %v1043 = vmul.f32 %v1035, %v1039
        %v1044 = vmul.f32 %v1034, %v1040
        %v1045 = vmul.f32 %v1036, %v1041
        %1046 = vrot.lane.b32.xlu0 %v891, 112
        %v1047 = vpop.permute.xlu0 %1046
        %1048 = vrot.lane.b32.xlu0 %v893, 112
        %v1049 = vpop.permute.xlu0 %1048
        %1050 = vrot.lane.b32.xlu0 %v892, 112
        %v1051 = vpop.permute.xlu0 %1050
        %1052 = vrot.lane.b32.xlu0 %v894, 112
        %v1053 = vpop.permute.xlu0 %1052
        %v1054 = vsel %vm536, %v1047, %v1051
        %v1055 = vsel %vm536, %v1049, %v1053
        %v1056 = vsel %vm536, %v1051, %v1047
        %v1057 = vsel %vm536, %v1053, %v1049
        %s1058 = scalar_lea.vmem [#allocation5], 800
        %v1059 = vld [vmem:[%s1058] sm:$0xff]
        %v1060 = vld [vmem:[%s1058 + $0x8] sm:$0xff]
        %v1061 = vld [vmem:[%s1058 + $0x10] sm:$0xff]
        %v1062 = vld [vmem:[%s1058 + $0x18] sm:$0xff]
        %v1063 = vmul.f32 %v1054, %v1059
        %v1064 = vmul.f32 %v1056, %v1060
        %v1065 = vmul.f32 %v1055, %v1061
        %v1066 = vmul.f32 %v1057, %v1062
        %v1067 = vadd.f32 %v1042, %v1063
        %v1068 = vadd.f32 %v1043, %v1064
        %v1069 = vadd.f32 %v1044, %v1065
        %v1070 = vadd.f32 %v1045, %v1066
        %1071 = vrot.lane.b32.xlu0 %v891, 111
        %v1072 = vpop.permute.xlu0 %1071
        %1073 = vrot.lane.b32.xlu0 %v893, 111
        %v1074 = vpop.permute.xlu0 %1073
        %1075 = vrot.lane.b32.xlu0 %v892, 111
        %v1076 = vpop.permute.xlu0 %1075
        %1077 = vrot.lane.b32.xlu0 %v894, 111
        %v1078 = vpop.permute.xlu0 %1077
        %v1079 = vsel %vm562, %v1072, %v1076
        %v1080 = vsel %vm562, %v1074, %v1078
        %v1081 = vsel %vm562, %v1076, %v1072
        %v1082 = vsel %vm562, %v1078, %v1074
        %s1083 = scalar_lea.vmem [#allocation5], 832
        %v1084 = vld [vmem:[%s1083] sm:$0xff]
        %v1085 = vld [vmem:[%s1083 + $0x8] sm:$0xff]
        %v1086 = vld [vmem:[%s1083 + $0x10] sm:$0xff]
        %v1087 = vld [vmem:[%s1083 + $0x18] sm:$0xff]
        %v1088 = vmul.f32 %v1079, %v1084
        %v1089 = vmul.f32 %v1081, %v1085
        %v1090 = vmul.f32 %v1080, %v1086
        %v1091 = vmul.f32 %v1082, %v1087
        %v1092 = vadd.f32 %v1067, %v1088
        %v1093 = vadd.f32 %v1068, %v1089
        %v1094 = vadd.f32 %v1069, %v1090
        %v1095 = vadd.f32 %v1070, %v1091
        %v1096 = vadd.f32 %v962, %v1092
        %v1097 = vadd.f32 %v963, %v1093
        %v1098 = vadd.f32 %v964, %v1094
        %v1099 = vadd.f32 %v965, %v1095
        %v1100 = vadd.f32 %v1096, %v1021
        %v1101 = vadd.f32 %v1097, %v1022
        %v1102 = vadd.f32 %v1098, %v1023
        %v1103 = vadd.f32 %v1099, %v1024
        %1104 = vset.pattern.permute.xlu0 4
        %1105 = vperm.xlu0 %1104, %v289
        %v1106 = vpop.permute.xlu0 %1105
        %1108 = vset.pattern.permute.xlu0 4
        %1109 = vperm.xlu0 %1108, %v290
        %v1110 = vpop.permute.xlu0 %1109
        %v1112 = vadd.f32 %v1100, %v1106
        %v1113 = vadd.f32 %v1101, %v1106
        %v1114 = vadd.f32 %v1102, %v1110
        %v1115 = vadd.f32 %v1103, %v1110
        %v1116 = vmax.f32 %v891, %v1112
        %v1117 = vmax.f32 %v892, %v1113
        %v1118 = vmax.f32 %v893, %v1114
        %v1119 = vmax.f32 %v894, %v1115
        %v1120 = vpack.c.bf16 %v1118, %v1116
        %v1121 = vpack.c.bf16 %v1119, %v1117
        %vm1122 = vcmask 130048
        %v1124 = vsel %vm1122, %v293, 0
        %1126 = vmatprep.subr.bf16.mxu0 %v1121
        %1127 = vmatpush1.bf16.msra.mxu0 %v1120
        %1128 = vmatprep.subr.bf16.mxu0 0
        %1129 = vmatpush1.bf16.msra.mxu0 0
        %1130 = vmatprep.subr.bf16.mxu0 0
        %1131 = vmatpush1.bf16.msra.mxu0 0
        %1132 = vmatprep.subr.bf16.mxu0 0
        %1133 = vmatpush1.bf16.msra.mxu0 0
        %1134 = vmatprep.subr.bf16.mxu0 0
        %1135 = vmatpush1.bf16.msra.mxu0 0
        %1136 = vmatprep.subr.bf16.mxu0 0
        %1137 = vmatpush1.bf16.msra.mxu0 0
        %1138 = vmatprep.subr.bf16.mxu0 0
        %1139 = vmatpush1.bf16.msra.mxu0 0
        %1140 = vmatprep.subr.bf16.mxu0 0
        %1141 = vmatpush1.bf16.msra.mxu0 0
        %1142 = vmatprep.subr.bf16.mxu0 0
        %1143 = vmatpush1.bf16.msra.mxu0 0
        %1144 = vmatprep.subr.bf16.mxu0 0
        %1145 = vmatpush1.bf16.msra.mxu0 0
        %1146 = vmatprep.subr.bf16.mxu0 0
        %1147 = vmatpush1.bf16.msra.mxu0 0
        %1148 = vmatprep.subr.bf16.mxu0 0
        %1149 = vmatpush1.bf16.msra.mxu0 0
        %1150 = vmatprep.subr.bf16.mxu0 0
        %1151 = vmatpush1.bf16.msra.mxu0 0
        %1152 = vmatprep.subr.bf16.mxu0 0
        %1153 = vmatpush1.bf16.msra.mxu0 0
        %1154 = vmatprep.subr.bf16.mxu0 0
        %1155 = vmatpush1.bf16.msra.mxu0 0
        %1156 = vmatprep.subr.bf16.mxu0 0
        %1157 = vmatpush1.bf16.msra.mxu0 0
        %1158 = vmatprep.mubr.bf16.mxu0 0
        %1159 = vmatmul.mubr.bf16.gmra.mrb[0].mxu0 %v1124
        %v1160 = vpop.f32.mrb[0].mxu0
        %v1161 = vadd.f32 0.0, %v1160
        %v1162 = vpop.f32.mrb[0].mxu0
        %v1163 = vadd.f32 0.0, %v1162
        %v1164 = vpop.f32.mrb[0].mxu0
        %v1165 = vpop.f32.mrb[0].mxu0
        %1166 = vdwg.mxu0
        %v1169 = vcombine.low %v1161, %v1163
        %v1171 = vadd.f32 %v295, %v1169
        %1173 = vset.pattern.permute.xlu0 0
        %1174 = vperm.xlu0 %1173, %v294
        %v1175 = vpop.permute.xlu0 %1174
        %v1177 = vunpack.c.l.s4 839922192
        %v1178 = vunpack.c.0.s8 %v1177
        %v1179 = vlaneseq
        %v1180 = vshrl.u32 %v1179, 7
        %v1181 = vsub.s32 %v1178, %v1180
        %v1182 = vrot.slane %v1175, %v1181
        %v1184 = vadd.f32 %v1171, %v1182
        %1185 = vst [vmem:[%s285] sm:$0xff] %v1184
        %s1186 = scalar_lea.vmem %s253, 8 [#allocation2]
        %v1187 = vld [vmem:[%s1186] sm:$0xff]
        %v1189 = vcombine.high %v1187, %v1187
        %v1191 = vpack.c.bf16 %v1187, %v1187
        %v1192 = vpack.c.bf16 %v1189, %v1189
        %v1194 = vsel %vm320, %v1191, 0
        %v1197 = vsel %vm320, %v1192, 0
        %1199 = vmatprep.subr.bf16.mxu0 %v1197
        %1200 = vmatpush1.bf16.msra.mxu0 %v1194
        %1201 = vmatprep.subr.bf16.mxu0 0
        %1202 = vmatpush1.bf16.msra.mxu0 0
        %1203 = vmatprep.subr.bf16.mxu0 0
        %1204 = vmatpush1.bf16.msra.mxu0 0
        %1205 = vmatprep.subr.bf16.mxu0 0
        %1206 = vmatpush1.bf16.msra.mxu0 0
        %1207 = vmatprep.subr.bf16.mxu0 0
        %1208 = vmatpush1.bf16.msra.mxu0 0
        %1209 = vmatprep.subr.bf16.mxu0 0
        %1210 = vmatpush1.bf16.msra.mxu0 0
        %1211 = vmatprep.subr.bf16.mxu0 0
        %1212 = vmatpush1.bf16.msra.mxu0 0
        %1213 = vmatprep.subr.bf16.mxu0 0
        %1214 = vmatpush1.bf16.msra.mxu0 0
        %1215 = vmatprep.subr.bf16.mxu0 0
        %1216 = vmatpush1.bf16.msra.mxu0 0
        %1217 = vmatprep.subr.bf16.mxu0 0
        %1218 = vmatpush1.bf16.msra.mxu0 0
        %1219 = vmatprep.subr.bf16.mxu0 0
        %1220 = vmatpush1.bf16.msra.mxu0 0
        %1221 = vmatprep.subr.bf16.mxu0 0
        %1222 = vmatpush1.bf16.msra.mxu0 0
        %1223 = vmatprep.subr.bf16.mxu0 0
        %1224 = vmatpush1.bf16.msra.mxu0 0
        %1225 = vmatprep.subr.bf16.mxu0 0
        %1226 = vmatpush1.bf16.msra.mxu0 0
        %1227 = vmatprep.subr.bf16.mxu0 0
        %1228 = vmatpush1.bf16.msra.mxu0 0
        %1229 = vmatprep.subr.bf16.mxu0 0
        %1230 = vmatpush1.bf16.msra.mxu0 0
        %1231 = vmatprep.mubr.bf16.mxu0 0
        %1232 = vmatmul.mubr.bf16.gmra.mrb[0].mxu0 %v318
        %v1233 = vpop.f32.mrb[0].mxu0
        %v1234 = vadd.f32 %v304, %v1233
        %v1235 = vpop.f32.mrb[0].mxu0
        %v1236 = vadd.f32 %v304, %v1235
        %v1237 = vpop.f32.mrb[0].mxu0
        %v1238 = vadd.f32 %v309, %v1237
        %v1239 = vpop.f32.mrb[0].mxu0
        %v1240 = vadd.f32 %v309, %v1239
        %1241 = vdwg.mxu0
        %1242 = vrot.lane.b32.xlu0 %v1234, 17
        %v1243 = vpop.permute.xlu0 %1242
        %1244 = vrot.lane.b32.xlu0 %v1238, 17
        %v1245 = vpop.permute.xlu0 %1244
        %1246 = vrot.lane.b32.xlu0 %v1236, 17
        %v1247 = vpop.permute.xlu0 %1246
        %1248 = vrot.lane.b32.xlu0 %v1240, 17
        %v1249 = vpop.permute.xlu0 %1248
        %v1250 = vsel %vm380, %v1243, %v1247
        %v1251 = vsel %vm380, %v1245, %v1249
        %v1252 = vsel %vm380, %v1247, %v1243
        %v1253 = vsel %vm380, %v1249, %v1245
        %v1254 = vld [vmem:[#allocation5] sm:$0xff]
        %v1255 = vld [vmem:[#allocation5 + $0x8] sm:$0xff]
        %v1256 = vld [vmem:[#allocation5 + $0x10] sm:$0xff]
        %v1257 = vld [vmem:[#allocation5 + $0x18] sm:$0xff]
        %v1258 = vmul.f32 %v1252, %v1254
        %v1259 = vmul.f32 %v1250, %v1255
        %v1260 = vmul.f32 %v1253, %v1256
        %v1261 = vmul.f32 %v1251, %v1257
        %1262 = vrot.lane.b32.xlu0 %v1234, 16
        %v1263 = vpop.permute.xlu0 %1262
        %1264 = vrot.lane.b32.xlu0 %v1238, 16
        %v1265 = vpop.permute.xlu0 %1264
        %1266 = vrot.lane.b32.xlu0 %v1236, 16
        %v1267 = vpop.permute.xlu0 %1266
        %1268 = vrot.lane.b32.xlu0 %v1240, 16
        %v1269 = vpop.permute.xlu0 %1268
        %v1270 = vsel %vm401, %v1263, %v1267
        %v1271 = vsel %vm401, %v1265, %v1269
        %v1272 = vsel %vm401, %v1267, %v1263
        %v1273 = vsel %vm401, %v1269, %v1265
        %v1274 = vld [vmem:[%s406] sm:$0xff]
        %v1275 = vld [vmem:[%s406 + $0x8] sm:$0xff]
        %v1276 = vld [vmem:[%s406 + $0x10] sm:$0xff]
        %v1277 = vld [vmem:[%s406 + $0x18] sm:$0xff]
        %v1278 = vmul.f32 %v1272, %v1274
        %v1279 = vmul.f32 %v1270, %v1275
        %v1280 = vmul.f32 %v1273, %v1276
        %v1281 = vmul.f32 %v1271, %v1277
        %v1282 = vadd.f32 %v1258, %v1278
        %v1283 = vadd.f32 %v1259, %v1279
        %v1284 = vadd.f32 %v1260, %v1280
        %v1285 = vadd.f32 %v1261, %v1281
        %1286 = vrot.lane.b32.xlu0 %v1234, 15
        %v1287 = vpop.permute.xlu0 %1286
        %1288 = vrot.lane.b32.xlu0 %v1238, 15
        %v1289 = vpop.permute.xlu0 %1288
        %1290 = vrot.lane.b32.xlu0 %v1236, 15
        %v1291 = vpop.permute.xlu0 %1290
        %1292 = vrot.lane.b32.xlu0 %v1240, 15
        %v1293 = vpop.permute.xlu0 %1292
        %v1294 = vsel %vm427, %v1287, %v1291
        %v1295 = vsel %vm427, %v1289, %v1293
        %v1296 = vsel %vm427, %v1291, %v1287
        %v1297 = vsel %vm427, %v1293, %v1289
        %v1298 = vld [vmem:[%s432] sm:$0xff]
        %v1299 = vld [vmem:[%s432 + $0x8] sm:$0xff]
        %v1300 = vld [vmem:[%s432 + $0x10] sm:$0xff]
        %v1301 = vld [vmem:[%s432 + $0x18] sm:$0xff]
        %v1302 = vmul.f32 %v1296, %v1298
        %v1303 = vmul.f32 %v1294, %v1299
        %v1304 = vmul.f32 %v1297, %v1300
        %v1305 = vmul.f32 %v1295, %v1301
        %v1306 = vadd.f32 %v1282, %v1302
        %v1307 = vadd.f32 %v1283, %v1303
        %v1308 = vadd.f32 %v1284, %v1304
        %v1309 = vadd.f32 %v1285, %v1305
        %1310 = vrot.lane.b32.xlu0 %v1234, 1
        %v1311 = vpop.permute.xlu0 %1310
        %1312 = vrot.lane.b32.xlu0 %v1238, 1
        %v1313 = vpop.permute.xlu0 %1312
        %1314 = vrot.lane.b32.xlu0 %v1236, 1
        %v1315 = vpop.permute.xlu0 %1314
        %1316 = vrot.lane.b32.xlu0 %v1240, 1
        %v1317 = vpop.permute.xlu0 %1316
        %v1318 = vsel %vm453, %v1311, %v1315
        %v1319 = vsel %vm453, %v1313, %v1317
        %v1320 = vsel %vm453, %v1315, %v1311
        %v1321 = vsel %vm453, %v1317, %v1313
        %v1322 = vld [vmem:[%s458] sm:$0xff]
        %v1323 = vld [vmem:[%s458 + $0x8] sm:$0xff]
        %v1324 = vld [vmem:[%s458 + $0x10] sm:$0xff]
        %v1325 = vld [vmem:[%s458 + $0x18] sm:$0xff]
        %v1326 = vmul.f32 %v1320, %v1322
        %v1327 = vmul.f32 %v1318, %v1323
        %v1328 = vmul.f32 %v1321, %v1324
        %v1329 = vmul.f32 %v1319, %v1325
        %v1330 = vld [vmem:[%s467] sm:$0xff]
        %v1331 = vld [vmem:[%s467 + $0x8] sm:$0xff]
        %v1332 = vld [vmem:[%s467 + $0x10] sm:$0xff]
        %v1333 = vld [vmem:[%s467 + $0x18] sm:$0xff]
        %v1334 = vmul.f32 %v1234, %v1330
        %v1335 = vmul.f32 %v1236, %v1331
        %v1336 = vmul.f32 %v1238, %v1332
        %v1337 = vmul.f32 %v1240, %v1333
        %v1338 = vadd.f32 %v1326, %v1334
        %v1339 = vadd.f32 %v1327, %v1335
        %v1340 = vadd.f32 %v1328, %v1336
        %v1341 = vadd.f32 %v1329, %v1337
        %1342 = vrot.lane.b32.xlu0 %v1234, 127
        %v1343 = vpop.permute.xlu0 %1342
        %1344 = vrot.lane.b32.xlu0 %v1238, 127
        %v1345 = vpop.permute.xlu0 %1344
        %1346 = vrot.lane.b32.xlu0 %v1236, 127
        %v1347 = vpop.permute.xlu0 %1346
        %1348 = vrot.lane.b32.xlu0 %v1240, 127
        %v1349 = vpop.permute.xlu0 %1348
        %v1350 = vsel %vm488, %v1343, %v1347
        %v1351 = vsel %vm488, %v1345, %v1349
        %v1352 = vsel %vm488, %v1347, %v1343
        %v1353 = vsel %vm488, %v1349, %v1345
        %v1354 = vld [vmem:[%s493] sm:$0xff]
        %v1355 = vld [vmem:[%s493 + $0x8] sm:$0xff]
        %v1356 = vld [vmem:[%s493 + $0x10] sm:$0xff]
        %v1357 = vld [vmem:[%s493 + $0x18] sm:$0xff]
        %v1358 = vmul.f32 %v1350, %v1354
        %v1359 = vmul.f32 %v1352, %v1355
        %v1360 = vmul.f32 %v1351, %v1356
        %v1361 = vmul.f32 %v1353, %v1357
        %v1362 = vadd.f32 %v1338, %v1358
        %v1363 = vadd.f32 %v1339, %v1359
        %v1364 = vadd.f32 %v1340, %v1360
        %v1365 = vadd.f32 %v1341, %v1361
        %1366 = vrot.lane.b32.xlu0 %v1234, 113
        %v1367 = vpop.permute.xlu0 %1366
        %1368 = vrot.lane.b32.xlu0 %v1238, 113
        %v1369 = vpop.permute.xlu0 %1368
        %1370 = vrot.lane.b32.xlu0 %v1236, 113
        %v1371 = vpop.permute.xlu0 %1370
        %1372 = vrot.lane.b32.xlu0 %v1240, 113
        %v1373 = vpop.permute.xlu0 %1372
        %v1374 = vsel %vm514, %v1367, %v1371
        %v1375 = vsel %vm514, %v1369, %v1373
        %v1376 = vsel %vm514, %v1371, %v1367
        %v1377 = vsel %vm514, %v1373, %v1369
        %v1378 = vld [vmem:[%s519] sm:$0xff]
        %v1379 = vld [vmem:[%s519 + $0x8] sm:$0xff]
        %v1380 = vld [vmem:[%s519 + $0x10] sm:$0xff]
        %v1381 = vld [vmem:[%s519 + $0x18] sm:$0xff]
        %v1382 = vmul.f32 %v1374, %v1378
        %v1383 = vmul.f32 %v1376, %v1379
        %v1384 = vmul.f32 %v1375, %v1380
        %v1385 = vmul.f32 %v1377, %v1381
        %1386 = vrot.lane.b32.xlu0 %v1234, 112
        %v1387 = vpop.permute.xlu0 %1386
        %1388 = vrot.lane.b32.xlu0 %v1238, 112
        %v1389 = vpop.permute.xlu0 %1388
        %1390 = vrot.lane.b32.xlu0 %v1236, 112
        %v1391 = vpop.permute.xlu0 %1390
        %1392 = vrot.lane.b32.xlu0 %v1240, 112
        %v1393 = vpop.permute.xlu0 %1392
        %v1394 = vsel %vm536, %v1387, %v1391
        %v1395 = vsel %vm536, %v1389, %v1393
        %v1396 = vsel %vm536, %v1391, %v1387
        %v1397 = vsel %vm536, %v1393, %v1389
        %v1398 = vld [vmem:[%s541] sm:$0xff]
        %v1399 = vld [vmem:[%s541 + $0x8] sm:$0xff]
        %v1400 = vld [vmem:[%s541 + $0x10] sm:$0xff]
        %v1401 = vld [vmem:[%s541 + $0x18] sm:$0xff]
        %v1402 = vmul.f32 %v1394, %v1398
        %v1403 = vmul.f32 %v1396, %v1399
        %v1404 = vmul.f32 %v1395, %v1400
        %v1405 = vmul.f32 %v1397, %v1401
        %v1406 = vadd.f32 %v1382, %v1402
        %v1407 = vadd.f32 %v1383, %v1403
        %v1408 = vadd.f32 %v1384, %v1404
        %v1409 = vadd.f32 %v1385, %v1405
        %1410 = vrot.lane.b32.xlu0 %v1234, 111
        %v1411 = vpop.permute.xlu0 %1410
        %1412 = vrot.lane.b32.xlu0 %v1238, 111
        %v1413 = vpop.permute.xlu0 %1412
        %1414 = vrot.lane.b32.xlu0 %v1236, 111
        %v1415 = vpop.permute.xlu0 %1414
        %1416 = vrot.lane.b32.xlu0 %v1240, 111
        %v1417 = vpop.permute.xlu0 %1416
        %v1418 = vsel %vm562, %v1411, %v1415
        %v1419 = vsel %vm562, %v1413, %v1417
        %v1420 = vsel %vm562, %v1415, %v1411
        %v1421 = vsel %vm562, %v1417, %v1413
        %v1422 = vld [vmem:[%s567] sm:$0xff]
        %v1423 = vld [vmem:[%s567 + $0x8] sm:$0xff]
        %v1424 = vld [vmem:[%s567 + $0x10] sm:$0xff]
        %v1425 = vld [vmem:[%s567 + $0x18] sm:$0xff]
        %v1426 = vmul.f32 %v1418, %v1422
        %v1427 = vmul.f32 %v1420, %v1423
        %v1428 = vmul.f32 %v1419, %v1424
        %v1429 = vmul.f32 %v1421, %v1425
        %v1430 = vadd.f32 %v1406, %v1426
        %v1431 = vadd.f32 %v1407, %v1427
        %v1432 = vadd.f32 %v1408, %v1428
        %v1433 = vadd.f32 %v1409, %v1429
        %v1434 = vadd.f32 %v1306, %v1430
        %v1435 = vadd.f32 %v1307, %v1431
        %v1436 = vadd.f32 %v1308, %v1432
        %v1437 = vadd.f32 %v1309, %v1433
        %v1438 = vadd.f32 %v1434, %v1362
        %v1439 = vadd.f32 %v1435, %v1363
        %v1440 = vadd.f32 %v1436, %v1364
        %v1441 = vadd.f32 %v1437, %v1365
        %v1442 = vadd.f32 %v1438, %v590
        %v1443 = vadd.f32 %v1439, %v590
        %v1444 = vadd.f32 %v1440, %v594
        %v1445 = vadd.f32 %v1441, %v594
        %v1446 = vmax.f32 %v1234, %v1442
        %v1447 = vmax.f32 %v1236, %v1443
        %v1448 = vmax.f32 %v1238, %v1444
        %v1449 = vmax.f32 %v1240, %v1445
        %1450 = vrot.lane.b32.xlu0 %v1446, 17
        %v1451 = vpop.permute.xlu0 %1450
        %1452 = vrot.lane.b32.xlu0 %v1448, 17
        %v1453 = vpop.permute.xlu0 %1452
        %1454 = vrot.lane.b32.xlu0 %v1447, 17
        %v1455 = vpop.permute.xlu0 %1454
        %1456 = vrot.lane.b32.xlu0 %v1449, 17
        %v1457 = vpop.permute.xlu0 %1456
        %v1458 = vsel %vm380, %v1451, %v1455
        %v1459 = vsel %vm380, %v1453, %v1457
        %v1460 = vsel %vm380, %v1455, %v1451
        %v1461 = vsel %vm380, %v1457, %v1453
        %v1462 = vld [vmem:[%s616] sm:$0xff]
        %v1463 = vld [vmem:[%s616 + $0x8] sm:$0xff]
        %v1464 = vld [vmem:[%s616 + $0x10] sm:$0xff]
        %v1465 = vld [vmem:[%s616 + $0x18] sm:$0xff]
        %v1466 = vmul.f32 %v1460, %v1462
        %v1467 = vmul.f32 %v1458, %v1463
        %v1468 = vmul.f32 %v1461, %v1464
        %v1469 = vmul.f32 %v1459, %v1465
        %1470 = vrot.lane.b32.xlu0 %v1446, 16
        %v1471 = vpop.permute.xlu0 %1470
        %1472 = vrot.lane.b32.xlu0 %v1448, 16
        %v1473 = vpop.permute.xlu0 %1472
        %1474 = vrot.lane.b32.xlu0 %v1447, 16
        %v1475 = vpop.permute.xlu0 %1474
        %1476 = vrot.lane.b32.xlu0 %v1449, 16
        %v1477 = vpop.permute.xlu0 %1476
        %v1478 = vsel %vm401, %v1471, %v1475
        %v1479 = vsel %vm401, %v1473, %v1477
        %v1480 = vsel %vm401, %v1475, %v1471
        %v1481 = vsel %vm401, %v1477, %v1473
        %v1482 = vld [vmem:[%s637] sm:$0xff]
        %v1483 = vld [vmem:[%s637 + $0x8] sm:$0xff]
        %v1484 = vld [vmem:[%s637 + $0x10] sm:$0xff]
        %v1485 = vld [vmem:[%s637 + $0x18] sm:$0xff]
        %v1486 = vmul.f32 %v1480, %v1482
        %v1487 = vmul.f32 %v1478, %v1483
        %v1488 = vmul.f32 %v1481, %v1484
        %v1489 = vmul.f32 %v1479, %v1485
        %v1490 = vadd.f32 %v1466, %v1486
        %v1491 = vadd.f32 %v1467, %v1487
        %v1492 = vadd.f32 %v1468, %v1488
        %v1493 = vadd.f32 %v1469, %v1489
        %1494 = vrot.lane.b32.xlu0 %v1446, 15
        %v1495 = vpop.permute.xlu0 %1494
        %1496 = vrot.lane.b32.xlu0 %v1448, 15
        %v1497 = vpop.permute.xlu0 %1496
        %1498 = vrot.lane.b32.xlu0 %v1447, 15
        %v1499 = vpop.permute.xlu0 %1498
        %1500 = vrot.lane.b32.xlu0 %v1449, 15
        %v1501 = vpop.permute.xlu0 %1500
        %v1502 = vsel %vm427, %v1495, %v1499
        %v1503 = vsel %vm427, %v1497, %v1501
        %v1504 = vsel %vm427, %v1499, %v1495
        %v1505 = vsel %vm427, %v1501, %v1497
        %v1506 = vld [vmem:[%s662] sm:$0xff]
        %v1507 = vld [vmem:[%s662 + $0x8] sm:$0xff]
        %v1508 = vld [vmem:[%s662 + $0x10] sm:$0xff]
        %v1509 = vld [vmem:[%s662 + $0x18] sm:$0xff]
        %v1510 = vmul.f32 %v1504, %v1506
        %v1511 = vmul.f32 %v1502, %v1507
        %v1512 = vmul.f32 %v1505, %v1508
        %v1513 = vmul.f32 %v1503, %v1509
        %v1514 = vadd.f32 %v1490, %v1510
        %v1515 = vadd.f32 %v1491, %v1511
        %v1516 = vadd.f32 %v1492, %v1512
        %v1517 = vadd.f32 %v1493, %v1513
        %1518 = vrot.lane.b32.xlu0 %v1446, 1
        %v1519 = vpop.permute.xlu0 %1518
        %1520 = vrot.lane.b32.xlu0 %v1448, 1
        %v1521 = vpop.permute.xlu0 %1520
        %1522 = vrot.lane.b32.xlu0 %v1447, 1
        %v1523 = vpop.permute.xlu0 %1522
        %1524 = vrot.lane.b32.xlu0 %v1449, 1
        %v1525 = vpop.permute.xlu0 %1524
        %v1526 = vsel %vm453, %v1519, %v1523
        %v1527 = vsel %vm453, %v1521, %v1525
        %v1528 = vsel %vm453, %v1523, %v1519
        %v1529 = vsel %vm453, %v1525, %v1521
        %v1530 = vld [vmem:[%s687] sm:$0xff]
        %v1531 = vld [vmem:[%s687 + $0x8] sm:$0xff]
        %v1532 = vld [vmem:[%s687 + $0x10] sm:$0xff]
        %v1533 = vld [vmem:[%s687 + $0x18] sm:$0xff]
        %v1534 = vmul.f32 %v1528, %v1530
        %v1535 = vmul.f32 %v1526, %v1531
        %v1536 = vmul.f32 %v1529, %v1532
        %v1537 = vmul.f32 %v1527, %v1533
        %v1538 = vld [vmem:[%s696] sm:$0xff]
        %v1539 = vld [vmem:[%s696 + $0x8] sm:$0xff]
        %v1540 = vld [vmem:[%s696 + $0x10] sm:$0xff]
        %v1541 = vld [vmem:[%s696 + $0x18] sm:$0xff]
        %v1542 = vmul.f32 %v1446, %v1538
        %v1543 = vmul.f32 %v1447, %v1539
        %v1544 = vmul.f32 %v1448, %v1540
        %v1545 = vmul.f32 %v1449, %v1541
        %v1546 = vadd.f32 %v1534, %v1542
        %v1547 = vadd.f32 %v1535, %v1543
        %v1548 = vadd.f32 %v1536, %v1544
        %v1549 = vadd.f32 %v1537, %v1545
        %1550 = vrot.lane.b32.xlu0 %v1446, 127
        %v1551 = vpop.permute.xlu0 %1550
        %1552 = vrot.lane.b32.xlu0 %v1448, 127
        %v1553 = vpop.permute.xlu0 %1552
        %1554 = vrot.lane.b32.xlu0 %v1447, 127
        %v1555 = vpop.permute.xlu0 %1554
        %1556 = vrot.lane.b32.xlu0 %v1449, 127
        %v1557 = vpop.permute.xlu0 %1556
        %v1558 = vsel %vm488, %v1551, %v1555
        %v1559 = vsel %vm488, %v1553, %v1557
        %v1560 = vsel %vm488, %v1555, %v1551
        %v1561 = vsel %vm488, %v1557, %v1553
        %v1562 = vld [vmem:[%s721] sm:$0xff]
        %v1563 = vld [vmem:[%s721 + $0x8] sm:$0xff]
        %v1564 = vld [vmem:[%s721 + $0x10] sm:$0xff]
        %v1565 = vld [vmem:[%s721 + $0x18] sm:$0xff]
        %v1566 = vmul.f32 %v1558, %v1562
        %v1567 = vmul.f32 %v1560, %v1563
        %v1568 = vmul.f32 %v1559, %v1564
        %v1569 = vmul.f32 %v1561, %v1565
        %v1570 = vadd.f32 %v1546, %v1566
        %v1571 = vadd.f32 %v1547, %v1567
        %v1572 = vadd.f32 %v1548, %v1568
        %v1573 = vadd.f32 %v1549, %v1569
        %1574 = vrot.lane.b32.xlu0 %v1446, 113
        %v1575 = vpop.permute.xlu0 %1574
        %1576 = vrot.lane.b32.xlu0 %v1448, 113
        %v1577 = vpop.permute.xlu0 %1576
        %1578 = vrot.lane.b32.xlu0 %v1447, 113
        %v1579 = vpop.permute.xlu0 %1578
        %1580 = vrot.lane.b32.xlu0 %v1449, 113
        %v1581 = vpop.permute.xlu0 %1580
        %v1582 = vsel %vm514, %v1575, %v1579
        %v1583 = vsel %vm514, %v1577, %v1581
        %v1584 = vsel %vm514, %v1579, %v1575
        %v1585 = vsel %vm514, %v1581, %v1577
        %v1586 = vld [vmem:[%s746] sm:$0xff]
        %v1587 = vld [vmem:[%s746 + $0x8] sm:$0xff]
        %v1588 = vld [vmem:[%s746 + $0x10] sm:$0xff]
        %v1589 = vld [vmem:[%s746 + $0x18] sm:$0xff]
        %v1590 = vmul.f32 %v1582, %v1586
        %v1591 = vmul.f32 %v1584, %v1587
        %v1592 = vmul.f32 %v1583, %v1588
        %v1593 = vmul.f32 %v1585, %v1589
        %1594 = vrot.lane.b32.xlu0 %v1446, 112
        %v1595 = vpop.permute.xlu0 %1594
        %1596 = vrot.lane.b32.xlu0 %v1448, 112
        %v1597 = vpop.permute.xlu0 %1596
        %1598 = vrot.lane.b32.xlu0 %v1447, 112
        %v1599 = vpop.permute.xlu0 %1598
        %1600 = vrot.lane.b32.xlu0 %v1449, 112
        %v1601 = vpop.permute.xlu0 %1600
        %v1602 = vsel %vm536, %v1595, %v1599
        %v1603 = vsel %vm536, %v1597, %v1601
        %v1604 = vsel %vm536, %v1599, %v1595
        %v1605 = vsel %vm536, %v1601, %v1597
        %v1606 = vld [vmem:[%s767] sm:$0xff]
        %v1607 = vld [vmem:[%s767 + $0x8] sm:$0xff]
        %v1608 = vld [vmem:[%s767 + $0x10] sm:$0xff]
        %v1609 = vld [vmem:[%s767 + $0x18] sm:$0xff]
        %v1610 = vmul.f32 %v1602, %v1606
        %v1611 = vmul.f32 %v1604, %v1607
        %v1612 = vmul.f32 %v1603, %v1608
        %v1613 = vmul.f32 %v1605, %v1609
        %v1614 = vadd.f32 %v1590, %v1610
        %v1615 = vadd.f32 %v1591, %v1611
        %v1616 = vadd.f32 %v1592, %v1612
        %v1617 = vadd.f32 %v1593, %v1613
        %1618 = vrot.lane.b32.xlu0 %v1446, 111
        %v1619 = vpop.permute.xlu0 %1618
        %1620 = vrot.lane.b32.xlu0 %v1448, 111
        %v1621 = vpop.permute.xlu0 %1620
        %1622 = vrot.lane.b32.xlu0 %v1447, 111
        %v1623 = vpop.permute.xlu0 %1622
        %1624 = vrot.lane.b32.xlu0 %v1449, 111
        %v1625 = vpop.permute.xlu0 %1624
        %v1626 = vsel %vm562, %v1619, %v1623
        %v1627 = vsel %vm562, %v1621, %v1625
        %v1628 = vsel %vm562, %v1623, %v1619
        %v1629 = vsel %vm562, %v1625, %v1621
        %v1630 = vld [vmem:[%s792] sm:$0xff]
        %v1631 = vld [vmem:[%s792 + $0x8] sm:$0xff]
        %v1632 = vld [vmem:[%s792 + $0x10] sm:$0xff]
        %v1633 = vld [vmem:[%s792 + $0x18] sm:$0xff]
        %v1634 = vmul.f32 %v1626, %v1630
        %v1635 = vmul.f32 %v1628, %v1631
        %v1636 = vmul.f32 %v1627, %v1632
        %v1637 = vmul.f32 %v1629, %v1633
        %v1638 = vadd.f32 %v1614, %v1634
        %v1639 = vadd.f32 %v1615, %v1635
        %v1640 = vadd.f32 %v1616, %v1636
        %v1641 = vadd.f32 %v1617, %v1637
        %v1642 = vadd.f32 %v1514, %v1638
        %v1643 = vadd.f32 %v1515, %v1639
        %v1644 = vadd.f32 %v1516, %v1640
        %v1645 = vadd.f32 %v1517, %v1641
        %v1646 = vadd.f32 %v1642, %v1570
        %v1647 = vadd.f32 %v1643, %v1571
        %v1648 = vadd.f32 %v1644, %v1572
        %v1649 = vadd.f32 %v1645, %v1573
        %v1650 = vadd.f32 %v1646, %v1647
        %1651 = vadd.xlane.f32.xlu0 %v1650
        %v1652 = vpop.xlane.xlu0 %1651
        %v1653 = vadd.f32 %v1648, %v1649
        %1654 = vadd.xlane.f32.xlu0 %v1653
        %v1655 = vpop.xlane.xlu0 %1654
        %v1656 = vmul.f32 %v1652, %v819
        %v1657 = vmul.f32 %v1655, %v819
        %v1658 = vmul.f32 %v1656, %v289
        %v1659 = vmul.f32 %v1657, %v290
        %v1660 = vsel %vm824, %v1658, 0.0
        %v1661 = vsel %vm824, %v1659, 0.0
        %v1662 = vadd.f32 %v1660, %v1661
        %v1663 = vrot.slane %v1662, 4
        %v1664 = vadd.f32 %v1662, %v1663
        %v1665 = vrot.slane %v1664, 2
        %v1666 = vadd.f32 %v1664, %v1665
        %v1667 = vrot.slane %v1666, 1
        %v1668 = vadd.f32 %v1666, %v1667
        %v1669 = vmax.f32 %v1668, 0.0
        %1671 = vrot.lane.b32.xlu0 %v1669, 4
        %v1672 = vpop.permute.xlu0 %1671
        %v1674 = vmul.f32 %v289, %v1672
        %v1675 = vmul.f32 %v290, %v1672
        %1678 = vrot.lane.b32.xlu0 %v1674, 119
        %v1679 = vpop.permute.xlu0 %1678
        %1680 = vrot.lane.b32.xlu0 %v1675, 119
        %v1681 = vpop.permute.xlu0 %1680
        %v1684 = vsel %vm316, %v1679, 0.0
        %1685 = vadd.xlane.f32.xlu0 %v1684
        %v1686 = vpop.xlane.xlu0 %1685
        %v1687 = vsel %vm316, %v1681, 0.0
        %1688 = vadd.xlane.f32.xlu0 %v1687
        %v1689 = vpop.xlane.xlu0 %1688
        %v1690 = vxor.u32 %v1686, 2147483648
        %v1691 = vxor.u32 %v1689, 2147483648
        %v1692 = vmul.f32 %v1690, 1.442695
        %v1693 = vpow.pop %v1692
        %v1694 = vmul.f32 %v1691, 1.442695
        %v1695 = vpow.pop %v1694
        %v1696 = vadd.f32 %v1693, 1.0
        %v1697 = vadd.f32 %v1695, 1.0
        %v1698 = vrcp.pop %v1696
        %v1699 = vmul.f32 1.0, %v1698
        %v1700 = vrcp.pop %v1697
        %v1701 = vmul.f32 1.0, %v1700
        %v1702 = vmul.f32 %v1646, %v1699
        %v1703 = vmul.f32 %v1647, %v1699
        %v1704 = vmul.f32 %v1648, %v1701
        %v1705 = vmul.f32 %v1649, %v1701
        %v1706 = vmul.f32 %v1702, %v873
        %v1707 = vmul.f32 %v1703, %v873
        %v1708 = vmul.f32 %v1704, %v877
        %v1709 = vmul.f32 %v1705, %v877
        %v1710 = vadd.f32 %v1706, %v885
        %v1711 = vadd.f32 %v1707, %v885
        %v1712 = vadd.f32 %v1708, %v889
        %v1713 = vadd.f32 %v1709, %v889
        %1714 = vrot.lane.b32.xlu0 %v1710, 17
        %v1715 = vpop.permute.xlu0 %1714
        %1716 = vrot.lane.b32.xlu0 %v1712, 17
        %v1717 = vpop.permute.xlu0 %1716
        %1718 = vrot.lane.b32.xlu0 %v1711, 17
        %v1719 = vpop.permute.xlu0 %1718
        %1720 = vrot.lane.b32.xlu0 %v1713, 17
        %v1721 = vpop.permute.xlu0 %1720
        %v1722 = vsel %vm380, %v1715, %v1719
        %v1723 = vsel %vm380, %v1717, %v1721
        %v1724 = vsel %vm380, %v1719, %v1715
        %v1725 = vsel %vm380, %v1721, %v1717
        %v1726 = vld [vmem:[%s907] sm:$0xff]
        %v1727 = vld [vmem:[%s907 + $0x8] sm:$0xff]
        %v1728 = vld [vmem:[%s907 + $0x10] sm:$0xff]
        %v1729 = vld [vmem:[%s907 + $0x18] sm:$0xff]
        %v1730 = vmul.f32 %v1724, %v1726
        %v1731 = vmul.f32 %v1722, %v1727
        %v1732 = vmul.f32 %v1725, %v1728
        %v1733 = vmul.f32 %v1723, %v1729
        %1734 = vrot.lane.b32.xlu0 %v1710, 16
        %v1735 = vpop.permute.xlu0 %1734
        %1736 = vrot.lane.b32.xlu0 %v1712, 16
        %v1737 = vpop.permute.xlu0 %1736
        %1738 = vrot.lane.b32.xlu0 %v1711, 16
        %v1739 = vpop.permute.xlu0 %1738
        %1740 = vrot.lane.b32.xlu0 %v1713, 16
        %v1741 = vpop.permute.xlu0 %1740
        %v1742 = vsel %vm401, %v1735, %v1739
        %v1743 = vsel %vm401, %v1737, %v1741
        %v1744 = vsel %vm401, %v1739, %v1735
        %v1745 = vsel %vm401, %v1741, %v1737
        %v1746 = vld [vmem:[%s928] sm:$0xff]
        %v1747 = vld [vmem:[%s928 + $0x8] sm:$0xff]
        %v1748 = vld [vmem:[%s928 + $0x10] sm:$0xff]
        %v1749 = vld [vmem:[%s928 + $0x18] sm:$0xff]
        %v1750 = vmul.f32 %v1744, %v1746
        %v1751 = vmul.f32 %v1742, %v1747
        %v1752 = vmul.f32 %v1745, %v1748
        %v1753 = vmul.f32 %v1743, %v1749
        %v1754 = vadd.f32 %v1730, %v1750
        %v1755 = vadd.f32 %v1731, %v1751
        %v1756 = vadd.f32 %v1732, %v1752
        %v1757 = vadd.f32 %v1733, %v1753
        %1758 = vrot.lane.b32.xlu0 %v1710, 15
        %v1759 = vpop.permute.xlu0 %1758
        %1760 = vrot.lane.b32.xlu0 %v1712, 15
        %v1761 = vpop.permute.xlu0 %1760
        %1762 = vrot.lane.b32.xlu0 %v1711, 15
        %v1763 = vpop.permute.xlu0 %1762
        %1764 = vrot.lane.b32.xlu0 %v1713, 15
        %v1765 = vpop.permute.xlu0 %1764
        %v1766 = vsel %vm427, %v1759, %v1763
        %v1767 = vsel %vm427, %v1761, %v1765
        %v1768 = vsel %vm427, %v1763, %v1759
        %v1769 = vsel %vm427, %v1765, %v1761
        %v1770 = vld [vmem:[%s953] sm:$0xff]
        %v1771 = vld [vmem:[%s953 + $0x8] sm:$0xff]
        %v1772 = vld [vmem:[%s953 + $0x10] sm:$0xff]
        %v1773 = vld [vmem:[%s953 + $0x18] sm:$0xff]
        %v1774 = vmul.f32 %v1768, %v1770
        %v1775 = vmul.f32 %v1766, %v1771
        %v1776 = vmul.f32 %v1769, %v1772
        %v1777 = vmul.f32 %v1767, %v1773
        %v1778 = vadd.f32 %v1754, %v1774
        %v1779 = vadd.f32 %v1755, %v1775
        %v1780 = vadd.f32 %v1756, %v1776
        %v1781 = vadd.f32 %v1757, %v1777
        %1782 = vrot.lane.b32.xlu0 %v1710, 1
        %v1783 = vpop.permute.xlu0 %1782
        %1784 = vrot.lane.b32.xlu0 %v1712, 1
        %v1785 = vpop.permute.xlu0 %1784
        %1786 = vrot.lane.b32.xlu0 %v1711, 1
        %v1787 = vpop.permute.xlu0 %1786
        %1788 = vrot.lane.b32.xlu0 %v1713, 1
        %v1789 = vpop.permute.xlu0 %1788
        %v1790 = vsel %vm453, %v1783, %v1787
        %v1791 = vsel %vm453, %v1785, %v1789
        %v1792 = vsel %vm453, %v1787, %v1783
        %v1793 = vsel %vm453, %v1789, %v1785
        %v1794 = vld [vmem:[%s978] sm:$0xff]
        %v1795 = vld [vmem:[%s978 + $0x8] sm:$0xff]
        %v1796 = vld [vmem:[%s978 + $0x10] sm:$0xff]
        %v1797 = vld [vmem:[%s978 + $0x18] sm:$0xff]
        %v1798 = vmul.f32 %v1792, %v1794
        %v1799 = vmul.f32 %v1790, %v1795
        %v1800 = vmul.f32 %v1793, %v1796
        %v1801 = vmul.f32 %v1791, %v1797
        %v1802 = vld [vmem:[%s987] sm:$0xff]
        %v1803 = vld [vmem:[%s987 + $0x8] sm:$0xff]
        %v1804 = vld [vmem:[%s987 + $0x10] sm:$0xff]
        %v1805 = vld [vmem:[%s987 + $0x18] sm:$0xff]
        %v1806 = vmul.f32 %v1710, %v1802
        %v1807 = vmul.f32 %v1711, %v1803
        %v1808 = vmul.f32 %v1712, %v1804
        %v1809 = vmul.f32 %v1713, %v1805
        %v1810 = vadd.f32 %v1798, %v1806
        %v1811 = vadd.f32 %v1799, %v1807
        %v1812 = vadd.f32 %v1800, %v1808
        %v1813 = vadd.f32 %v1801, %v1809
        %1814 = vrot.lane.b32.xlu0 %v1710, 127
        %v1815 = vpop.permute.xlu0 %1814
        %1816 = vrot.lane.b32.xlu0 %v1712, 127
        %v1817 = vpop.permute.xlu0 %1816
        %1818 = vrot.lane.b32.xlu0 %v1711, 127
        %v1819 = vpop.permute.xlu0 %1818
        %1820 = vrot.lane.b32.xlu0 %v1713, 127
        %v1821 = vpop.permute.xlu0 %1820
        %v1822 = vsel %vm488, %v1815, %v1819
        %v1823 = vsel %vm488, %v1817, %v1821
        %v1824 = vsel %vm488, %v1819, %v1815
        %v1825 = vsel %vm488, %v1821, %v1817
        %v1826 = vld [vmem:[%s1012] sm:$0xff]
        %v1827 = vld [vmem:[%s1012 + $0x8] sm:$0xff]
        %v1828 = vld [vmem:[%s1012 + $0x10] sm:$0xff]
        %v1829 = vld [vmem:[%s1012 + $0x18] sm:$0xff]
        %v1830 = vmul.f32 %v1822, %v1826
        %v1831 = vmul.f32 %v1824, %v1827
        %v1832 = vmul.f32 %v1823, %v1828
        %v1833 = vmul.f32 %v1825, %v1829
        %v1834 = vadd.f32 %v1810, %v1830
        %v1835 = vadd.f32 %v1811, %v1831
        %v1836 = vadd.f32 %v1812, %v1832
        %v1837 = vadd.f32 %v1813, %v1833
        %1838 = vrot.lane.b32.xlu0 %v1710, 113
        %v1839 = vpop.permute.xlu0 %1838
        %1840 = vrot.lane.b32.xlu0 %v1712, 113
        %v1841 = vpop.permute.xlu0 %1840
        %1842 = vrot.lane.b32.xlu0 %v1711, 113
        %v1843 = vpop.permute.xlu0 %1842
        %1844 = vrot.lane.b32.xlu0 %v1713, 113
        %v1845 = vpop.permute.xlu0 %1844
        %v1846 = vsel %vm514, %v1839, %v1843
        %v1847 = vsel %vm514, %v1841, %v1845
        %v1848 = vsel %vm514, %v1843, %v1839
        %v1849 = vsel %vm514, %v1845, %v1841
        %v1850 = vld [vmem:[%s1037] sm:$0xff]
        %v1851 = vld [vmem:[%s1037 + $0x8] sm:$0xff]
        %v1852 = vld [vmem:[%s1037 + $0x10] sm:$0xff]
        %v1853 = vld [vmem:[%s1037 + $0x18] sm:$0xff]
        %v1854 = vmul.f32 %v1846, %v1850
        %v1855 = vmul.f32 %v1848, %v1851
        %v1856 = vmul.f32 %v1847, %v1852
        %v1857 = vmul.f32 %v1849, %v1853
        %1858 = vrot.lane.b32.xlu0 %v1710, 112
        %v1859 = vpop.permute.xlu0 %1858
        %1860 = vrot.lane.b32.xlu0 %v1712, 112
        %v1861 = vpop.permute.xlu0 %1860
        %1862 = vrot.lane.b32.xlu0 %v1711, 112
        %v1863 = vpop.permute.xlu0 %1862
        %1864 = vrot.lane.b32.xlu0 %v1713, 112
        %v1865 = vpop.permute.xlu0 %1864
        %v1866 = vsel %vm536, %v1859, %v1863
        %v1867 = vsel %vm536, %v1861, %v1865
        %v1868 = vsel %vm536, %v1863, %v1859
        %v1869 = vsel %vm536, %v1865, %v1861
        %v1870 = vld [vmem:[%s1058] sm:$0xff]
        %v1871 = vld [vmem:[%s1058 + $0x8] sm:$0xff]
        %v1872 = vld [vmem:[%s1058 + $0x10] sm:$0xff]
        %v1873 = vld [vmem:[%s1058 + $0x18] sm:$0xff]
        %v1874 = vmul.f32 %v1866, %v1870
        %v1875 = vmul.f32 %v1868, %v1871
        %v1876 = vmul.f32 %v1867, %v1872
        %v1877 = vmul.f32 %v1869, %v1873
        %v1878 = vadd.f32 %v1854, %v1874
        %v1879 = vadd.f32 %v1855, %v1875
        %v1880 = vadd.f32 %v1856, %v1876
        %v1881 = vadd.f32 %v1857, %v1877
        %1882 = vrot.lane.b32.xlu0 %v1710, 111
        %v1883 = vpop.permute.xlu0 %1882
        %1884 = vrot.lane.b32.xlu0 %v1712, 111
        %v1885 = vpop.permute.xlu0 %1884
        %1886 = vrot.lane.b32.xlu0 %v1711, 111
        %v1887 = vpop.permute.xlu0 %1886
        %1888 = vrot.lane.b32.xlu0 %v1713, 111
        %v1889 = vpop.permute.xlu0 %1888
        %v1890 = vsel %vm562, %v1883, %v1887
        %v1891 = vsel %vm562, %v1885, %v1889
        %v1892 = vsel %vm562, %v1887, %v1883
        %v1893 = vsel %vm562, %v1889, %v1885
        %v1894 = vld [vmem:[%s1083] sm:$0xff]
        %v1895 = vld [vmem:[%s1083 + $0x8] sm:$0xff]
        %v1896 = vld [vmem:[%s1083 + $0x10] sm:$0xff]
        %v1897 = vld [vmem:[%s1083 + $0x18] sm:$0xff]
        %v1898 = vmul.f32 %v1890, %v1894
        %v1899 = vmul.f32 %v1892, %v1895
        %v1900 = vmul.f32 %v1891, %v1896
        %v1901 = vmul.f32 %v1893, %v1897
        %v1902 = vadd.f32 %v1878, %v1898
        %v1903 = vadd.f32 %v1879, %v1899
        %v1904 = vadd.f32 %v1880, %v1900
        %v1905 = vadd.f32 %v1881, %v1901
        %v1906 = vadd.f32 %v1778, %v1902
        %v1907 = vadd.f32 %v1779, %v1903
        %v1908 = vadd.f32 %v1780, %v1904
        %v1909 = vadd.f32 %v1781, %v1905
        %v1910 = vadd.f32 %v1906, %v1834
        %v1911 = vadd.f32 %v1907, %v1835
        %v1912 = vadd.f32 %v1908, %v1836
        %v1913 = vadd.f32 %v1909, %v1837
        %v1914 = vadd.f32 %v1910, %v1106
        %v1915 = vadd.f32 %v1911, %v1106
        %v1916 = vadd.f32 %v1912, %v1110
        %v1917 = vadd.f32 %v1913, %v1110
        %v1918 = vmax.f32 %v1710, %v1914
        %v1919 = vmax.f32 %v1711, %v1915
        %v1920 = vmax.f32 %v1712, %v1916
        %v1921 = vmax.f32 %v1713, %v1917
        %v1922 = vpack.c.bf16 %v1920, %v1918
        %v1923 = vpack.c.bf16 %v1921, %v1919
        %1924 = vmatprep.subr.bf16.mxu0 %v1923
        %1925 = vmatpush1.bf16.msra.mxu0 %v1922
        %1926 = vmatprep.subr.bf16.mxu0 0
        %1927 = vmatpush1.bf16.msra.mxu0 0
        %1928 = vmatprep.subr.bf16.mxu0 0
        %1929 = vmatpush1.bf16.msra.mxu0 0
        %1930 = vmatprep.subr.bf16.mxu0 0
        %1931 = vmatpush1.bf16.msra.mxu0 0
        %1932 = vmatprep.subr.bf16.mxu0 0
        %1933 = vmatpush1.bf16.msra.mxu0 0
        %1934 = vmatprep.subr.bf16.mxu0 0
        %1935 = vmatpush1.bf16.msra.mxu0 0
        %1936 = vmatprep.subr.bf16.mxu0 0
        %1937 = vmatpush1.bf16.msra.mxu0 0
        %1938 = vmatprep.subr.bf16.mxu0 0
        %1939 = vmatpush1.bf16.msra.mxu0 0
        %1940 = vmatprep.subr.bf16.mxu0 0
        %1941 = vmatpush1.bf16.msra.mxu0 0
        %1942 = vmatprep.subr.bf16.mxu0 0
        %1943 = vmatpush1.bf16.msra.mxu0 0
        %1944 = vmatprep.subr.bf16.mxu0 0
        %1945 = vmatpush1.bf16.msra.mxu0 0
        %1946 = vmatprep.subr.bf16.mxu0 0
        %1947 = vmatpush1.bf16.msra.mxu0 0
        %1948 = vmatprep.subr.bf16.mxu0 0
        %1949 = vmatpush1.bf16.msra.mxu0 0
        %1950 = vmatprep.subr.bf16.mxu0 0
        %1951 = vmatpush1.bf16.msra.mxu0 0
        %1952 = vmatprep.subr.bf16.mxu0 0
        %1953 = vmatpush1.bf16.msra.mxu0 0
        %1954 = vmatprep.subr.bf16.mxu0 0
        %1955 = vmatpush1.bf16.msra.mxu0 0
        %1956 = vmatprep.mubr.bf16.mxu0 0
        %1957 = vmatmul.mubr.bf16.gmra.mrb[0].mxu0 %v1124
        %v1958 = vpop.f32.mrb[0].mxu0
        %v1959 = vadd.f32 0.0, %v1958
        %v1960 = vpop.f32.mrb[0].mxu0
        %v1961 = vadd.f32 0.0, %v1960
        %v1962 = vpop.f32.mrb[0].mxu0
        %v1963 = vpop.f32.mrb[0].mxu0
        %1964 = vdwg.mxu0
        %v1967 = vcombine.low %v1959, %v1961
        %v1969 = vadd.f32 %v1187, %v1967
        %v1970 = vadd.f32 %v1969, %v1182
        %s1971 = scalar_lea.vmem %s285, 8 [#allocation7]
        %1972 = vst [vmem:[%s1971] sm:$0xff] %v1970
        %s1973 = sand.u32 %s163, 1
        %s1974 = scalar_lea.sflag [#allocation4], %s1973
        %s1975 = sand.u32 %s163, 1
        %s1976 = smul.addr %s1975, 16
        %s1977 = scalar_lea.vmem [#allocation7], %s1976
        // Predicated region
        $region53: #{tpu_custom_call.1} parent=43 // pred_check
          %p1978 = pneg %p173
        $region54: #{tpu_custom_call.1} parent=43 // pred_check_branch
          %1980 = sbr.rel (%p1978) target = $region56
        $region55: #{tpu_custom_call.1} parent=43 // pred_region
          %s1981 = smul.u32 2, %s24
          %s1983 = ssub.s32 256, 256
          %1984 = vsyncadd %s1974, %s1983
          %s1985 = smul.addr %s1981, 2
          %s1986 = smul.addr %s1985, 64
          %s1987 = scalar_lea.hbm %s6, %s1986
          %s1988 = sshll.u32 %s1977, 4
          %s1989 = int_to_ptr.vmem [resolvable:$true] %s1988
          %1994 = dma.vmem_to_hbm [thread:$0]  %s1989, 256, %s1987, %s1974, 128, 128, 8
        $region56: #{tpu_custom_call.1} parent=43 // pred_fallthru
          _
      $region44: #{tpu_custom_call.1} parent=5 // pred_fallthru
        _
      %p1995 = scmp.le.s32.totalorder 2, %s19
      // Predicated region
      $region57: #{tpu_custom_call.1} parent=5 // pred_check
        %p1996 = pneg %p1995
      $region58: #{tpu_custom_call.1} parent=5 // pred_check_branch
        %1998 = sbr.rel (%p1996) target = $region60
      $region59: #{tpu_custom_call.1} parent=5 // pred_region
        %s1999 = ssub.s32 %s19, 2
        // Predicated region
        $region61: #{tpu_custom_call.1} parent=59 // pred_check
          %p2000 = pneg %p179
        $region62: #{tpu_custom_call.1} parent=59 // pred_check_branch
          %2002 = sbr.rel (%p2000) target = $region64
        $region63: #{tpu_custom_call.1} parent=59 // pred_region
          %s2003 = sand.u32 %s164, 1
          %s2004 = scalar_lea.sflag [#allocation4], %s2003
          %s2005 = sand.u32 %s164, 1
          %s2006 = smul.addr %s2005, 16
          %s2007 = scalar_lea.vmem [#allocation7], %s2006
          %2008 = dma.done %s2004, 256
        $region64: #{tpu_custom_call.1} parent=59 // pred_fallthru
          _
      $region60: #{tpu_custom_call.1} parent=5 // pred_fallthru
        _
    $region6: #{tpu_custom_call.1} parent=1 // loop_footer
      %s23 = sadd.s32 1, %s19
    $region7: #{tpu_custom_call.1} parent=1 // loop_footer_branch
      %18 = sbr.rel target = $region3
    $region8: #{tpu_custom_call.1} parent=1 // loop_exit
      _
    %2009 = vsyncpa [#allocation3], 1
    %s2010 = scalar_lea.sflag [#allocation3], 1
    %2011 = vsyncpa %s2010, 1
    %2012 = vsyncpa [#allocation6], 1
    %2013 = vsyncpa [#allocation4], 1
    %s2014 = scalar_lea.sflag [#allocation4], 1
    %2015 = vsyncpa %s2014, 1

</llo_original>
